<compile_context>
chip_gen: v5e
topology: v5e:2x2
jax: 0.10.0
libtpu: 0.0.40
codegen_flags: <defaults>
</compile_context>

<pallas_src>
import functools
import numpy as np
import jax
import jax.numpy as jnp
from jax.experimental import pallas as pl
from jax.experimental.pallas import tpu as pltpu


# ---------------------------------------------------------------------------
# Static layout helpers (numpy, trace-time only)
# ---------------------------------------------------------------------------
def s_order_mask(h, w):
    """Boustrophedon ('s'-order) flatten permutation: s-position t -> raster index."""
    mask = np.arange(h * w).reshape(h, w)
    mask[1::2, :] = mask[1::2, ::-1].copy()
    return mask.reshape(-1)


def linear_interp_indices(in_len, out_len):
    """F.interpolate(mode='linear', align_corners=False) gather indices."""
    scale = in_len / out_len
    src = scale * (np.arange(out_len) + 0.5) - 0.5
    src = np.maximum(src, 0.0)
    i0 = np.minimum(np.floor(src).astype(np.int32), in_len - 1)
    i1 = np.minimum(i0 + 1, in_len - 1)
    lam = (src - i0).astype(np.float32)
    return i0, i1, lam


def build_qpath_matrices(h, w, m, m_pad):
    """R[t] = S_t @ G, shape (9, hw, m_pad):  q1 @ R[t] == interp(flatten_s(shift_t(q1))).

    S_t is the zero-padded 3x3-tap shift operator in raster order, G folds the
    s-order flatten + linear interpolation (columns m..m_pad are zero so lane
    padding stays exactly zero)."""
    hw = h * w
    mask = s_order_mask(h, w)
    i0, i1, lam = linear_interp_indices(hw, m)
    g = np.zeros((hw, m_pad), np.float32)
    for j in range(m):
        g[mask[i0[j]], j] += 1.0 - lam[j]
        g[mask[i1[j]], j] += lam[j]
    r = np.zeros((9, hw, m_pad), np.float32)
    for t in range(9):
        di, dj = t // 3, t % 3
        s = np.zeros((hw, hw), np.float32)
        for i in range(h):
            for j in range(w):
                si, sj = i + di - 1, j + dj - 1
                if 0 <= si < h and 0 <= sj < w:
                    s[si * w + sj, i * w + j] = 1.0
        r[t] = s @ g
    return r


# ---------------------------------------------------------------------------
# Fused Pallas kernel: one grid step == BB batch elements
# ---------------------------------------------------------------------------
def _attention1_kernel(x_ref, y_ref, w_kv_ref, b_kv_ref, w_cat_ref, r_cat_ref,
                       b_qp_ref, w_po_ref, b_po_ref, scale_ref, hmask_ref,
                       kmask_ref, o_ref, xw_ref, s_ref, *, bb, mp):
    f32, bf16 = jnp.float32, jnp.bfloat16
    dim = w_po_ref.shape[0]
    m = x_ref.shape[-1]

    # ---- stage x into a lane-dense (dim, bb*mp) bf16 scratch ----------------
    # batch i occupies lanes [i*mp, i*mp+m); pad lanes stay exactly zero.
    xw_ref[...] = jnp.zeros(xw_ref.shape, xw_ref.dtype)
    for i in range(bb):
        xw_ref[:, i * mp:i * mp + m] = x_ref[i * dim:(i + 1) * dim, :].astype(bf16)

    # ---- kv = Conv1d(dim, 2*dim, 1)(x), all bb batches in ONE wide matmul ----
    kv = jnp.dot(w_kv_ref[...], xw_ref[...], preferred_element_type=f32) + b_kv_ref[...]
    k_wide = kv[:dim, :] * kmask_ref[...]     # zero the bias leaked into pad lanes
    v_wide = kv[dim:, :]                      # pad lanes never reach the output

    # ---- q path as two large matmuls ----------------------------------------
    # YR[b*dim+c, t*mp+l] = (y_b @ R[t])[c, l]
    yr = jnp.dot(y_ref[...].astype(bf16), r_cat_ref[...], preferred_element_type=f32)
    # restack tap dim onto sublanes / batch dim onto lanes: 9*bb aligned copies
    for i in range(bb):
        for t in range(9):
            s_ref[t * dim:(t + 1) * dim, i * mp:(i + 1) * mp] = (
                yr[i * dim:(i + 1) * dim, t * mp:(t + 1) * mp].astype(bf16))
    # qm = sum_t (W_dw[t] @ W_q) @ (y @ R[t]) + [b_dw, b_q contributions]
    qm = jnp.dot(w_cat_ref[...], s_ref[...], preferred_element_type=f32) + b_qp_ref[...]

    # ---- per-batch channel attention on aligned 128-lane slices -------------
    eps2 = 1e-24                              # (1e-12)^2 : torch F.normalize eps
    hmask = hmask_ref[...]                    # 0/1 block-diagonal head mask
    scale = scale_ref[...]                    # temperature per channel row
    ctx = []
    for i in range(bb):
        q_i = qm[:, i * mp:(i + 1) * mp]      # pad lanes are exactly zero
        k_i = k_wide[:, i * mp:(i + 1) * mp]  # pad lanes masked to zero
        v_i = v_wide[:, i * mp:(i + 1) * mp]
        q_inv = jax.lax.rsqrt(jnp.maximum(jnp.sum(q_i * q_i, -1, keepdims=True), eps2))
        k_inv = jax.lax.rsqrt(jnp.maximum(jnp.sum(k_i * k_i, -1, keepdims=True), eps2))
        qn = (q_i * (q_inv * scale)).astype(bf16)   # temperature folded into q
        kn = (k_i * k_inv).astype(bf16)
        attn = jax.lax.dot_general(qn, kn, (((1,), (1,)), ((), ())),
                                   preferred_element_type=f32)      # (dim, dim)
        p = jnp.exp(attn - jnp.max(attn, -1, keepdims=True)) * hmask
        p = p * pl.reciprocal(jnp.sum(p, -1, keepdims=True), approx=True)
        ctx.append(jnp.dot(p.astype(bf16), v_i.astype(bf16),
                           preferred_element_type=f32).astype(bf16))
    ctx_wide = ctx[0] if bb == 1 else jnp.concatenate(ctx, axis=1)

    # ---- project_out = Conv1d(dim, dim, 1): one wide matmul, narrow stores ---
    out = jnp.dot(w_po_ref[...], ctx_wide, preferred_element_type=f32) + b_po_ref[...]
    for i in range(bb):
        o_ref[i * dim:(i + 1) * dim, :] = out[:, i * mp:i * mp + m].astype(o_ref.dtype)


def _pick_block_b(b):
    """Batches per grid step: widest divisor that still keeps >= 2 grid steps
    (on v7x each of the two TensorCores then takes its own step)."""
    for bb in (8, 4, 2):
        if b % bb == 0 and b // bb >= 2:
            return bb
    return 1


def attention1_forward(params, x, y, num_heads, block_b=None):
    b, dim, m = x.shape
    _, _, h, w = y.shape
    hw = h * w
    mp = ((m + 127) // 128) * 128              # lane-dense per-batch width
    bb = block_b if block_b is not None else _pick_block_b(b)
    assert b % bb == 0 and dim % num_heads == 0
    grid = b // bb
    c = dim // num_heads
    f32, bf16 = jnp.float32, jnp.bfloat16

    # ---- trace-time constant folding (exact f32; bf16 cast only at the end) --
    r = build_qpath_matrices(h, w, m, mp)                            # (9, hw, mp)
    r_cat = jnp.asarray(np.transpose(r, (1, 0, 2)).reshape(hw, 9 * mp), bf16)
    w_dw_taps = jnp.transpose(params["qdw_w"], (2, 3, 0, 1)).reshape(9, dim, dim)
    wc = jnp.einsum("toi,ij->toj", w_dw_taps, params["q_w"])         # W_dw[t] @ W_q
    w_cat = jnp.transpose(wc, (1, 0, 2)).reshape(dim, 9 * dim).astype(bf16)
    valid = np.zeros((1, mp), np.float32)
    valid[0, :m] = 1.0
    rsum = jnp.asarray(r.sum(axis=1))                                # (9, mp)
    bias_tap = jnp.einsum("toi,i->to", w_dw_taps, params["q_b"][:, 0])
    b_qp = params["qdw_b"] * jnp.asarray(valid) + jnp.einsum("to,tl->ol", bias_tap, rsum)
    b_qp_wide = jnp.tile(b_qp, (1, bb))                              # pad lanes = 0
    kmask = jnp.asarray(np.tile(valid, (1, bb)))                     # (1, bb*mp)
    head = np.repeat(np.arange(num_heads), c)
    head_mask = jnp.asarray((head[:, None] == head[None, :]).astype(np.float32))
    scale = jnp.repeat(params["temperature"].reshape(num_heads), c).reshape(dim, 1)
    w_kv = params["kv_w"].astype(bf16)
    w_po = params["po_w"].astype(bf16)

    x2 = x.reshape(b * dim, m)                 # free reshapes: no pad, no transpose
    y2 = y.reshape(b * dim, hw)

    def const(a):
        return pl.BlockSpec(a.shape, lambda i, _n=a.ndim: (0,) * _n)

    kernel = functools.partial(_attention1_kernel, bb=bb, mp=mp)
    out2 = pl.pallas_call(
        kernel,
        out_shape=jax.ShapeDtypeStruct((b * dim, m), f32),
        grid=(grid,),
        in_specs=[
            pl.BlockSpec((bb * dim, m), lambda i: (i, 0)),           # x (bb batches)
            pl.BlockSpec((bb * dim, hw), lambda i: (i, 0)),          # y (bb batches)
            const(w_kv), const(params["kv_b"]),                      # kv conv
            const(w_cat), const(r_cat), const(b_qp_wide),            # folded q path
            const(w_po), const(params["po_b"]),                      # project_out
            const(scale), const(head_mask), const(kmask),            # attn constants
        ],
        out_specs=pl.BlockSpec((bb * dim, m), lambda i: (i, 0)),
        scratch_shapes=[pltpu.VMEM((dim, bb * mp), bf16),            # x, batch-on-lanes
                        pltpu.VMEM((9 * dim, bb * mp), bf16)],       # restacked q taps
        compiler_params=pltpu.CompilerParams(
            dimension_semantics=("parallel",),
            vmem_limit_bytes=32 * 1024 * 1024),
    )(x2, y2, w_kv, params["kv_b"], w_cat, r_cat, b_qp_wide,
      w_po, params["po_b"], scale, head_mask, kmask)
    return out2.reshape(b, dim, m)


# ---------------------------------------------------------------------------
# Pure-JAX reference (faithful to the PyTorch module; correctness check only)
# ---------------------------------------------------------------------------
def attention1_reference(params, x, y, num_heads):
    b, dim, m = x.shape
    _, _, h, w = y.shape
    hw = h * w
    c = dim // num_heads
    hp = jax.lax.Precision.HIGHEST

    kv = jnp.einsum("oc,bcl->bol", params["kv_w"], x, precision=hp) + params["kv_b"][None]
    k, v = kv[:, :dim, :], kv[:, dim:, :]

    q1 = jnp.einsum("oc,bcl->bol", params["q_w"], y.reshape(b, dim, hw),
                    precision=hp) + params["q_b"][None]
    q1 = q1.reshape(b, dim, h, w)
    q3 = jax.lax.conv_general_dilated(
        q1, params["qdw_w"], (1, 1), ((1, 1), (1, 1)),
        dimension_numbers=("NCHW", "OIHW", "NCHW"), precision=hp)
    q3 = (q3 + params["qdw_b"].reshape(1, dim, 1, 1)).reshape(b, dim, hw)

    q_flat = jnp.take(q3, jnp.asarray(s_order_mask(h, w)), axis=2)
    i0, i1, lam = linear_interp_indices(hw, m)
    lam = jnp.asarray(lam)[None, None, :]
    q_m = (jnp.take(q_flat, jnp.asarray(i0), axis=2) * (1.0 - lam)
           + jnp.take(q_flat, jnp.asarray(i1), axis=2) * lam)

    qh = q_m.reshape(b, num_heads, c, m)
    kh = k.reshape(b, num_heads, c, m)
    vh = v.reshape(b, num_heads, c, m)
    qn = qh / jnp.maximum(jnp.sqrt(jnp.sum(qh * qh, -1, keepdims=True)), 1e-12)
    kn = kh / jnp.maximum(jnp.sqrt(jnp.sum(kh * kh, -1, keepdims=True)), 1e-12)
    attn = jnp.einsum("bhcm,bhdm->bhcd", qn, kn, precision=hp) * params["temperature"][None]
    attn = jax.nn.softmax(attn, axis=-1)
    out = jnp.einsum("bhcd,bhdm->bhcm", attn, vh, precision=hp).reshape(b, dim, m)
    return jnp.einsum("oc,bcl->bol", params["po_w"], out, precision=hp) + params["po_b"][None]


# ---------------------------------------------------------------------------
# Parameters (deterministic, PyTorch-style uniform init)
# ---------------------------------------------------------------------------
def init_params(key, dim, num_heads):
    ks = jax.random.split(key, 8)

    def conv_w(k, cout, cin, ksize=1):
        fan_in = cin * ksize * ksize
        bound = 1.0 / np.sqrt(fan_in)
        shape = (cout, cin) if ksize == 1 else (cout, cin, ksize, ksize)
        return jax.random.uniform(k, shape, jnp.float32, -bound, bound)

    def conv_b(k, cout, fan_in):
        bound = 1.0 / np.sqrt(fan_in)
        return jax.random.uniform(k, (cout, 1), jnp.float32, -bound, bound)

    return dict(
        temperature=jnp.ones((num_heads, 1, 1), jnp.float32),
        kv_w=conv_w(ks[0], 2 * dim, dim),
        kv_b=conv_b(ks[1], 2 * dim, dim),
        q_w=conv_w(ks[2], dim, dim),
        q_b=conv_b(ks[3], dim, dim),
        qdw_w=conv_w(ks[4], dim, dim, 3),
        qdw_b=conv_b(ks[5], dim, dim * 9),
        po_w=conv_w(ks[6], dim, dim),
        po_b=conv_b(ks[7], dim, dim),
    )


# ---------------------------------------------------------------------------
if __name__ == "__main__":
    B, DIM, HEADS = 4, 32, 4          # B=4 -> BB=2 batches/step, grid=2
    M, H, W = 48, 8, 8

    key = jax.random.PRNGKey(0)
    kx, ky, kp = jax.random.split(key, 3)
    x = jax.random.normal(kx, (B, DIM, M), jnp.float32)        # (b, dim, m)
    y = jax.random.normal(ky, (B, DIM, H, W), jnp.float32)     # (b, dim, h, w)
    params = init_params(kp, DIM, HEADS)

    fwd = jax.jit(functools.partial(attention1_forward, num_heads=HEADS))
    out = jax.block_until_ready(fwd(params, x, y))

    ref = jax.block_until_ready(attention1_reference(params, x, y, HEADS))
    assert out.shape == (B, DIM, M)
    # Tolerance reflects bf16 MXU operands (f32 accumulation) vs. an all-f32
    # HIGHEST-precision reference; structural errors would be O(1).
    np.testing.assert_allclose(np.asarray(out), np.asarray(ref),
                               atol=2e-2, rtol=2e-2)
    print("KERNEL_OK")
</pallas_src>

<mosaic_0001>
module attributes {stable_mosaic.version = 11 : i64} {
  func.func @_attention1_kernel(%arg0: i32, %arg1: memref<64x48xf32, #tpu.memory_space<vmem>>, %arg2: memref<64x64xf32, #tpu.memory_space<vmem>>, %arg3: memref<64x32xbf16, #tpu.memory_space<vmem>>, %arg4: memref<64x1xf32, #tpu.memory_space<vmem>>, %arg5: memref<32x288xbf16, #tpu.memory_space<vmem>>, %arg6: memref<64x1152xbf16, #tpu.memory_space<vmem>>, %arg7: memref<32x256xf32, #tpu.memory_space<vmem>>, %arg8: memref<32x32xbf16, #tpu.memory_space<vmem>>, %arg9: memref<32x1xf32, #tpu.memory_space<vmem>>, %arg10: memref<32x1xf32, #tpu.memory_space<vmem>>, %arg11: memref<32x32xf32, #tpu.memory_space<vmem>>, %arg12: memref<1x256xf32, #tpu.memory_space<vmem>>, %arg13: memref<64x48xf32, #tpu.memory_space<vmem>>, %arg14: memref<32x256xbf16, #tpu.memory_space<vmem>>, %arg15: memref<288x256xbf16, #tpu.memory_space<vmem>>) attributes {dimension_semantics = [#tpu.dimension_semantics<parallel>], iteration_bounds = array<i64: 2>, scalar_prefetch = 0 : i64, scratch_operands = 2 : i64, tpu.core_type = #tpu.core_type<tc>, window_params = [{transform_indices = @transform_0, window_bounds = array<i64: 64, 48>}, {transform_indices = @transform_1, window_bounds = array<i64: 64, 64>}, {pipeline_mode = #tpu.pipeline_mode<synchronous>, transform_indices = @transform_2, window_bounds = array<i64: 64, 32>}, {pipeline_mode = #tpu.pipeline_mode<synchronous>, transform_indices = @transform_3, window_bounds = array<i64: 64, 1>}, {pipeline_mode = #tpu.pipeline_mode<synchronous>, transform_indices = @transform_4, window_bounds = array<i64: 32, 288>}, {pipeline_mode = #tpu.pipeline_mode<synchronous>, transform_indices = @transform_5, window_bounds = array<i64: 64, 1152>}, {pipeline_mode = #tpu.pipeline_mode<synchronous>, transform_indices = @transform_6, window_bounds = array<i64: 32, 256>}, {pipeline_mode = #tpu.pipeline_mode<synchronous>, transform_indices = @transform_7, window_bounds = array<i64: 32, 32>}, {pipeline_mode = #tpu.pipeline_mode<synchronous>, transform_indices = @transform_8, window_bounds = array<i64: 32, 1>}, {pipeline_mode = #tpu.pipeline_mode<synchronous>, transform_indices = @transform_9, window_bounds = array<i64: 32, 1>}, {pipeline_mode = #tpu.pipeline_mode<synchronous>, transform_indices = @transform_10, window_bounds = array<i64: 32, 32>}, {pipeline_mode = #tpu.pipeline_mode<synchronous>, transform_indices = @transform_11, window_bounds = array<i64: 1, 256>}, {transform_indices = @transform_12, window_bounds = array<i64: 64, 48>}]} {
    %cst = arith.constant 0.000000e+00 : bf16
    %0 = vector.broadcast %cst : bf16 to vector<32x256xbf16>
    %c0 = arith.constant 0 : index
    %c0_0 = arith.constant 0 : index
    %1 = vector.load %arg14[%c0, %c0_0] : memref<32x256xbf16, #tpu.memory_space<vmem>>, vector<32x256xbf16>
    tpu.vector_store %arg14[%c0, %c0_0], %0 {strides = array<i32>} : memref<32x256xbf16, #tpu.memory_space<vmem>>, vector<32x256xbf16>,
    %c0_1 = arith.constant 0 : index
    %c0_2 = arith.constant 0 : index
    %2 = vector.load %arg1[%c0_1, %c0_2] : memref<64x48xf32, #tpu.memory_space<vmem>>, vector<32x48xf32>
    %3 = arith.truncf %2 : vector<32x48xf32> to vector<32x48xbf16>
    %c0_3 = arith.constant 0 : index
    %c0_4 = arith.constant 0 : index
    %4 = vector.load %arg14[%c0_3, %c0_4] : memref<32x256xbf16, #tpu.memory_space<vmem>>, vector<32x48xbf16>
    tpu.vector_store %arg14[%c0_3, %c0_4], %3 {strides = array<i32>} : memref<32x256xbf16, #tpu.memory_space<vmem>>, vector<32x48xbf16>,
    %c32 = arith.constant 32 : index
    %c0_5 = arith.constant 0 : index
    %5 = vector.load %arg1[%c32, %c0_5] : memref<64x48xf32, #tpu.memory_space<vmem>>, vector<32x48xf32>
    %6 = arith.truncf %5 : vector<32x48xf32> to vector<32x48xbf16>
    %c0_6 = arith.constant 0 : index
    %c128 = arith.constant 128 : index
    %7 = vector.load %arg14[%c0_6, %c128] : memref<32x256xbf16, #tpu.memory_space<vmem>>, vector<32x48xbf16>
    tpu.vector_store %arg14[%c0_6, %c128], %6 {strides = array<i32>} : memref<32x256xbf16, #tpu.memory_space<vmem>>, vector<32x48xbf16>,
    %c0_7 = arith.constant 0 : index
    %c0_8 = arith.constant 0 : index
    %8 = vector.load %arg3[%c0_7, %c0_8] : memref<64x32xbf16, #tpu.memory_space<vmem>>, vector<64x32xbf16>
    %c0_9 = arith.constant 0 : index
    %c0_10 = arith.constant 0 : index
    %9 = vector.load %arg14[%c0_9, %c0_10] : memref<32x256xbf16, #tpu.memory_space<vmem>>, vector<32x256xbf16>
    %cst_11 = arith.constant dense<0.000000e+00> : vector<64x256xf32>
    %10 = tpu.matmul %8, %9, %cst_11 {dimension_numbers = #tpu.dot_dimension_numbers<[1], [0], [0], [1], [0, 0, 1, 1], [], []>} : vector<64x32xbf16>, vector<32x256xbf16>, vector<64x256xf32> -> vector<64x256xf32>
    %c0_12 = arith.constant 0 : index
    %c0_13 = arith.constant 0 : index
    %11 = vector.load %arg4[%c0_12, %c0_13] : memref<64x1xf32, #tpu.memory_space<vmem>>, vector<64x1xf32>
    %12 = vector.broadcast %11 : vector<64x1xf32> to vector<64x256xf32>
    %13 = arith.addf %10, %12 : vector<64x256xf32>
    %14 = vector.extract_strided_slice %13 {offsets = [0, 0], sizes = [32, 256], strides = [1, 1]} : vector<64x256xf32> to vector<32x256xf32>
    %c0_14 = arith.constant 0 : index
    %c0_15 = arith.constant 0 : index
    %15 = vector.load %arg12[%c0_14, %c0_15] : memref<1x256xf32, #tpu.memory_space<vmem>>, vector<1x256xf32>
    %16 = vector.broadcast %15 : vector<1x256xf32> to vector<32x256xf32>
    %17 = arith.mulf %14, %16 : vector<32x256xf32>
    %18 = vector.extract_strided_slice %13 {offsets = [32, 0], sizes = [32, 256], strides = [1, 1]} : vector<64x256xf32> to vector<32x256xf32>
    %c0_16 = arith.constant 0 : index
    %c0_17 = arith.constant 0 : index
    %19 = vector.load %arg2[%c0_16, %c0_17] : memref<64x64xf32, #tpu.memory_space<vmem>>, vector<64x64xf32>
    %20 = arith.truncf %19 : vector<64x64xf32> to vector<64x64xbf16>
    %c0_18 = arith.constant 0 : index
    %c0_19 = arith.constant 0 : index
    %21 = vector.load %arg6[%c0_18, %c0_19] : memref<64x1152xbf16, #tpu.memory_space<vmem>>, vector<64x1152xbf16>
    %cst_20 = arith.constant dense<0.000000e+00> : vector<64x1152xf32>
    %22 = tpu.matmul %20, %21, %cst_20 {dimension_numbers = #tpu.dot_dimension_numbers<[1], [0], [0], [1], [0, 0, 1, 1], [], []>} : vector<64x64xbf16>, vector<64x1152xbf16>, vector<64x1152xf32> -> vector<64x1152xf32>
    %23 = vector.extract_strided_slice %22 {offsets = [0, 0], sizes = [32, 128], strides = [1, 1]} : vector<64x1152xf32> to vector<32x128xf32>
    %24 = arith.truncf %23 : vector<32x128xf32> to vector<32x128xbf16>
    %c0_21 = arith.constant 0 : index
    %c0_22 = arith.constant 0 : index
    %25 = vector.load %arg15[%c0_21, %c0_22] : memref<288x256xbf16, #tpu.memory_space<vmem>>, vector<32x128xbf16>
    tpu.vector_store %arg15[%c0_21, %c0_22], %24 {strides = array<i32>} : memref<288x256xbf16, #tpu.memory_space<vmem>>, vector<32x128xbf16>,
    %26 = vector.extract_strided_slice %22 {offsets = [0, 128], sizes = [32, 128], strides = [1, 1]} : vector<64x1152xf32> to vector<32x128xf32>
    %27 = arith.truncf %26 : vector<32x128xf32> to vector<32x128xbf16>
    %c32_23 = arith.constant 32 : index
    %c0_24 = arith.constant 0 : index
    %28 = vector.load %arg15[%c32_23, %c0_24] : memref<288x256xbf16, #tpu.memory_space<vmem>>, vector<32x128xbf16>
    tpu.vector_store %arg15[%c32_23, %c0_24], %27 {strides = array<i32>} : memref<288x256xbf16, #tpu.memory_space<vmem>>, vector<32x128xbf16>,
    %29 = vector.extract_strided_slice %22 {offsets = [0, 256], sizes = [32, 128], strides = [1, 1]} : vector<64x1152xf32> to vector<32x128xf32>
    %30 = arith.truncf %29 : vector<32x128xf32> to vector<32x128xbf16>
    %c64 = arith.constant 64 : index
    %c0_25 = arith.constant 0 : index
    %31 = vector.load %arg15[%c64, %c0_25] : memref<288x256xbf16, #tpu.memory_space<vmem>>, vector<32x128xbf16>
    tpu.vector_store %arg15[%c64, %c0_25], %30 {strides = array<i32>} : memref<288x256xbf16, #tpu.memory_space<vmem>>, vector<32x128xbf16>,
    %32 = vector.extract_strided_slice %22 {offsets = [0, 384], sizes = [32, 128], strides = [1, 1]} : vector<64x1152xf32> to vector<32x128xf32>
    %33 = arith.truncf %32 : vector<32x128xf32> to vector<32x128xbf16>
    %c96 = arith.constant 96 : index
    %c0_26 = arith.constant 0 : index
    %34 = vector.load %arg15[%c96, %c0_26] : memref<288x256xbf16, #tpu.memory_space<vmem>>, vector<32x128xbf16>
    tpu.vector_store %arg15[%c96, %c0_26], %33 {strides = array<i32>} : memref<288x256xbf16, #tpu.memory_space<vmem>>, vector<32x128xbf16>,
    %35 = vector.extract_strided_slice %22 {offsets = [0, 512], sizes = [32, 128], strides = [1, 1]} : vector<64x1152xf32> to vector<32x128xf32>
    %36 = arith.truncf %35 : vector<32x128xf32> to vector<32x128xbf16>
    %c128_27 = arith.constant 128 : index
    %c0_28 = arith.constant 0 : index
    %37 = vector.load %arg15[%c128_27, %c0_28] : memref<288x256xbf16, #tpu.memory_space<vmem>>, vector<32x128xbf16>
    tpu.vector_store %arg15[%c128_27, %c0_28], %36 {strides = array<i32>} : memref<288x256xbf16, #tpu.memory_space<vmem>>, vector<32x128xbf16>,
    %38 = vector.extract_strided_slice %22 {offsets = [0, 640], sizes = [32, 128], strides = [1, 1]} : vector<64x1152xf32> to vector<32x128xf32>
    %39 = arith.truncf %38 : vector<32x128xf32> to vector<32x128xbf16>
    %c160 = arith.constant 160 : index
    %c0_29 = arith.constant 0 : index
    %40 = vector.load %arg15[%c160, %c0_29] : memref<288x256xbf16, #tpu.memory_space<vmem>>, vector<32x128xbf16>
    tpu.vector_store %arg15[%c160, %c0_29], %39 {strides = array<i32>} : memref<288x256xbf16, #tpu.memory_space<vmem>>, vector<32x128xbf16>,
    %41 = vector.extract_strided_slice %22 {offsets = [0, 768], sizes = [32, 128], strides = [1, 1]} : vector<64x1152xf32> to vector<32x128xf32>
    %42 = arith.truncf %41 : vector<32x128xf32> to vector<32x128xbf16>
    %c192 = arith.constant 192 : index
    %c0_30 = arith.constant 0 : index
    %43 = vector.load %arg15[%c192, %c0_30] : memref<288x256xbf16, #tpu.memory_space<vmem>>, vector<32x128xbf16>
    tpu.vector_store %arg15[%c192, %c0_30], %42 {strides = array<i32>} : memref<288x256xbf16, #tpu.memory_space<vmem>>, vector<32x128xbf16>,
    %44 = vector.extract_strided_slice %22 {offsets = [0, 896], sizes = [32, 128], strides = [1, 1]} : vector<64x1152xf32> to vector<32x128xf32>
    %45 = arith.truncf %44 : vector<32x128xf32> to vector<32x128xbf16>
    %c224 = arith.constant 224 : index
    %c0_31 = arith.constant 0 : index
    %46 = vector.load %arg15[%c224, %c0_31] : memref<288x256xbf16, #tpu.memory_space<vmem>>, vector<32x128xbf16>
    tpu.vector_store %arg15[%c224, %c0_31], %45 {strides = array<i32>} : memref<288x256xbf16, #tpu.memory_space<vmem>>, vector<32x128xbf16>,
    %47 = vector.extract_strided_slice %22 {offsets = [0, 1024], sizes = [32, 128], strides = [1, 1]} : vector<64x1152xf32> to vector<32x128xf32>
    %48 = arith.truncf %47 : vector<32x128xf32> to vector<32x128xbf16>
    %c256 = arith.constant 256 : index
    %c0_32 = arith.constant 0 : index
    %49 = vector.load %arg15[%c256, %c0_32] : memref<288x256xbf16, #tpu.memory_space<vmem>>, vector<32x128xbf16>
    tpu.vector_store %arg15[%c256, %c0_32], %48 {strides = array<i32>} : memref<288x256xbf16, #tpu.memory_space<vmem>>, vector<32x128xbf16>,
    %50 = vector.extract_strided_slice %22 {offsets = [32, 0], sizes = [32, 128], strides = [1, 1]} : vector<64x1152xf32> to vector<32x128xf32>
    %51 = arith.truncf %50 : vector<32x128xf32> to vector<32x128xbf16>
    %c0_33 = arith.constant 0 : index
    %c128_34 = arith.constant 128 : index
    %52 = vector.load %arg15[%c0_33, %c128_34] : memref<288x256xbf16, #tpu.memory_space<vmem>>, vector<32x128xbf16>
    tpu.vector_store %arg15[%c0_33, %c128_34], %51 {strides = array<i32>} : memref<288x256xbf16, #tpu.memory_space<vmem>>, vector<32x128xbf16>,
    %53 = vector.extract_strided_slice %22 {offsets = [32, 128], sizes = [32, 128], strides = [1, 1]} : vector<64x1152xf32> to vector<32x128xf32>
    %54 = arith.truncf %53 : vector<32x128xf32> to vector<32x128xbf16>
    %c32_35 = arith.constant 32 : index
    %c128_36 = arith.constant 128 : index
    %55 = vector.load %arg15[%c32_35, %c128_36] : memref<288x256xbf16, #tpu.memory_space<vmem>>, vector<32x128xbf16>
    tpu.vector_store %arg15[%c32_35, %c128_36], %54 {strides = array<i32>} : memref<288x256xbf16, #tpu.memory_space<vmem>>, vector<32x128xbf16>,
    %56 = vector.extract_strided_slice %22 {offsets = [32, 256], sizes = [32, 128], strides = [1, 1]} : vector<64x1152xf32> to vector<32x128xf32>
    %57 = arith.truncf %56 : vector<32x128xf32> to vector<32x128xbf16>
    %c64_37 = arith.constant 64 : index
    %c128_38 = arith.constant 128 : index
    %58 = vector.load %arg15[%c64_37, %c128_38] : memref<288x256xbf16, #tpu.memory_space<vmem>>, vector<32x128xbf16>
    tpu.vector_store %arg15[%c64_37, %c128_38], %57 {strides = array<i32>} : memref<288x256xbf16, #tpu.memory_space<vmem>>, vector<32x128xbf16>,
    %59 = vector.extract_strided_slice %22 {offsets = [32, 384], sizes = [32, 128], strides = [1, 1]} : vector<64x1152xf32> to vector<32x128xf32>
    %60 = arith.truncf %59 : vector<32x128xf32> to vector<32x128xbf16>
    %c96_39 = arith.constant 96 : index
    %c128_40 = arith.constant 128 : index
    %61 = vector.load %arg15[%c96_39, %c128_40] : memref<288x256xbf16, #tpu.memory_space<vmem>>, vector<32x128xbf16>
    tpu.vector_store %arg15[%c96_39, %c128_40], %60 {strides = array<i32>} : memref<288x256xbf16, #tpu.memory_space<vmem>>, vector<32x128xbf16>,
    %62 = vector.extract_strided_slice %22 {offsets = [32, 512], sizes = [32, 128], strides = [1, 1]} : vector<64x1152xf32> to vector<32x128xf32>
    %63 = arith.truncf %62 : vector<32x128xf32> to vector<32x128xbf16>
    %c128_41 = arith.constant 128 : index
    %c128_42 = arith.constant 128 : index
    %64 = vector.load %arg15[%c128_41, %c128_42] : memref<288x256xbf16, #tpu.memory_space<vmem>>, vector<32x128xbf16>
    tpu.vector_store %arg15[%c128_41, %c128_42], %63 {strides = array<i32>} : memref<288x256xbf16, #tpu.memory_space<vmem>>, vector<32x128xbf16>,
    %65 = vector.extract_strided_slice %22 {offsets = [32, 640], sizes = [32, 128], strides = [1, 1]} : vector<64x1152xf32> to vector<32x128xf32>
    %66 = arith.truncf %65 : vector<32x128xf32> to vector<32x128xbf16>
    %c160_43 = arith.constant 160 : index
    %c128_44 = arith.constant 128 : index
    %67 = vector.load %arg15[%c160_43, %c128_44] : memref<288x256xbf16, #tpu.memory_space<vmem>>, vector<32x128xbf16>
    tpu.vector_store %arg15[%c160_43, %c128_44], %66 {strides = array<i32>} : memref<288x256xbf16, #tpu.memory_space<vmem>>, vector<32x128xbf16>,
    %68 = vector.extract_strided_slice %22 {offsets = [32, 768], sizes = [32, 128], strides = [1, 1]} : vector<64x1152xf32> to vector<32x128xf32>
    %69 = arith.truncf %68 : vector<32x128xf32> to vector<32x128xbf16>
    %c192_45 = arith.constant 192 : index
    %c128_46 = arith.constant 128 : index
    %70 = vector.load %arg15[%c192_45, %c128_46] : memref<288x256xbf16, #tpu.memory_space<vmem>>, vector<32x128xbf16>
    tpu.vector_store %arg15[%c192_45, %c128_46], %69 {strides = array<i32>} : memref<288x256xbf16, #tpu.memory_space<vmem>>, vector<32x128xbf16>,
    %71 = vector.extract_strided_slice %22 {offsets = [32, 896], sizes = [32, 128], strides = [1, 1]} : vector<64x1152xf32> to vector<32x128xf32>
    %72 = arith.truncf %71 : vector<32x128xf32> to vector<32x128xbf16>
    %c224_47 = arith.constant 224 : index
    %c128_48 = arith.constant 128 : index
    %73 = vector.load %arg15[%c224_47, %c128_48] : memref<288x256xbf16, #tpu.memory_space<vmem>>, vector<32x128xbf16>
    tpu.vector_store %arg15[%c224_47, %c128_48], %72 {strides = array<i32>} : memref<288x256xbf16, #tpu.memory_space<vmem>>, vector<32x128xbf16>,
    %74 = vector.extract_strided_slice %22 {offsets = [32, 1024], sizes = [32, 128], strides = [1, 1]} : vector<64x1152xf32> to vector<32x128xf32>
    %75 = arith.truncf %74 : vector<32x128xf32> to vector<32x128xbf16>
    %c256_49 = arith.constant 256 : index
    %c128_50 = arith.constant 128 : index
    %76 = vector.load %arg15[%c256_49, %c128_50] : memref<288x256xbf16, #tpu.memory_space<vmem>>, vector<32x128xbf16>
    tpu.vector_store %arg15[%c256_49, %c128_50], %75 {strides = array<i32>} : memref<288x256xbf16, #tpu.memory_space<vmem>>, vector<32x128xbf16>,
    %c0_51 = arith.constant 0 : index
    %c0_52 = arith.constant 0 : index
    %77 = vector.load %arg5[%c0_51, %c0_52] : memref<32x288xbf16, #tpu.memory_space<vmem>>, vector<32x288xbf16>
    %c0_53 = arith.constant 0 : index
    %c0_54 = arith.constant 0 : index
    %78 = vector.load %arg15[%c0_53, %c0_54] : memref<288x256xbf16, #tpu.memory_space<vmem>>, vector<288x256xbf16>
    %cst_55 = arith.constant dense<0.000000e+00> : vector<32x256xf32>
    %79 = tpu.matmul %77, %78, %cst_55 {dimension_numbers = #tpu.dot_dimension_numbers<[1], [0], [0], [1], [0, 0, 1, 1], [], []>} : vector<32x288xbf16>, vector<288x256xbf16>, vector<32x256xf32> -> vector<32x256xf32>
    %c0_56 = arith.constant 0 : index
    %c0_57 = arith.constant 0 : index
    %80 = vector.load %arg7[%c0_56, %c0_57] : memref<32x256xf32, #tpu.memory_space<vmem>>, vector<32x256xf32>
    %81 = arith.addf %79, %80 : vector<32x256xf32>
    %c0_58 = arith.constant 0 : index
    %c0_59 = arith.constant 0 : index
    %82 = vector.load %arg11[%c0_58, %c0_59] : memref<32x32xf32, #tpu.memory_space<vmem>>, vector<32x32xf32>
    %c0_60 = arith.constant 0 : index
    %c0_61 = arith.constant 0 : index
    %83 = vector.load %arg10[%c0_60, %c0_61] : memref<32x1xf32, #tpu.memory_space<vmem>>, vector<32x1xf32>
    %84 = vector.extract_strided_slice %81 {offsets = [0, 0], sizes = [32, 128], strides = [1, 1]} : vector<32x256xf32> to vector<32x128xf32>
    %85 = vector.extract_strided_slice %17 {offsets = [0, 0], sizes = [32, 128], strides = [1, 1]} : vector<32x256xf32> to vector<32x128xf32>
    %86 = vector.extract_strided_slice %18 {offsets = [0, 0], sizes = [32, 128], strides = [1, 1]} : vector<32x256xf32> to vector<32x128xf32>
    %87 = arith.mulf %84, %84 : vector<32x128xf32>
    %cst_62 = arith.constant dense<0.000000e+00> : vector<32xf32>
    %88 = vector.multi_reduction <add>, %87, %cst_62 [1] : vector<32x128xf32> to vector<32xf32>
    %89 = vector.shape_cast %88 : vector<32xf32> to vector<32x1xf32>
    %cst_63 = arith.constant 1.000000e-24 : f32
    %90 = vector.broadcast %cst_63 : f32 to vector<32x1xf32>
    %91 = arith.maximumf %89, %90 : vector<32x1xf32>
    %92 = math.rsqrt %91 : vector<32x1xf32>
    %93 = arith.mulf %85, %85 : vector<32x128xf32>
    %cst_64 = arith.constant dense<0.000000e+00> : vector<32xf32>
    %94 = vector.multi_reduction <add>, %93, %cst_64 [1] : vector<32x128xf32> to vector<32xf32>
    %95 = vector.shape_cast %94 : vector<32xf32> to vector<32x1xf32>
    %cst_65 = arith.constant 1.000000e-24 : f32
    %96 = vector.broadcast %cst_65 : f32 to vector<32x1xf32>
    %97 = arith.maximumf %95, %96 : vector<32x1xf32>
    %98 = math.rsqrt %97 : vector<32x1xf32>
    %99 = arith.mulf %92, %83 : vector<32x1xf32>
    %100 = vector.broadcast %99 : vector<32x1xf32> to vector<32x128xf32>
    %101 = arith.mulf %84, %100 : vector<32x128xf32>
    %102 = arith.truncf %101 : vector<32x128xf32> to vector<32x128xbf16>
    %103 = vector.broadcast %98 : vector<32x1xf32> to vector<32x128xf32>
    %104 = arith.mulf %85, %103 : vector<32x128xf32>
    %105 = arith.truncf %104 : vector<32x128xf32> to vector<32x128xbf16>
    %cst_66 = arith.constant dense<0.000000e+00> : vector<32x32xf32>
    %106 = tpu.matmul %102, %105, %cst_66 {dimension_numbers = #tpu.dot_dimension_numbers<[1], [1], [0], [0], [0, 0, 1, 0], [], []>} : vector<32x128xbf16>, vector<32x128xbf16>, vector<32x32xf32> -> vector<32x32xf32>
    %cst_67 = arith.constant dense<0xFF800000> : vector<32xf32>
    %107 = vector.multi_reduction <maximumf>, %106, %cst_67 [1] : vector<32x32xf32> to vector<32xf32>
    %108 = vector.shape_cast %107 : vector<32xf32> to vector<32x1xf32>
    %109 = vector.broadcast %108 : vector<32x1xf32> to vector<32x32xf32>
    %110 = arith.subf %106, %109 : vector<32x32xf32>
    %111 = math.exp %110 : vector<32x32xf32>
    %112 = arith.mulf %111, %82 : vector<32x32xf32>
    %cst_68 = arith.constant dense<0.000000e+00> : vector<32xf32>
    %113 = vector.multi_reduction <add>, %112, %cst_68 [1] : vector<32x32xf32> to vector<32xf32>
    %114 = vector.shape_cast %113 : vector<32xf32> to vector<32x1xf32>
    %115 = tpu.reciprocal %114 {approx = true} : vector<32x1xf32> -> vector<32x1xf32>
    %116 = vector.broadcast %115 : vector<32x1xf32> to vector<32x32xf32>
    %117 = arith.mulf %112, %116 : vector<32x32xf32>
    %118 = arith.truncf %117 : vector<32x32xf32> to vector<32x32xbf16>
    %119 = arith.truncf %86 : vector<32x128xf32> to vector<32x128xbf16>
    %cst_69 = arith.constant dense<0.000000e+00> : vector<32x128xf32>
    %120 = tpu.matmul %118, %119, %cst_69 {dimension_numbers = #tpu.dot_dimension_numbers<[1], [0], [0], [1], [0, 0, 1, 1], [], []>} : vector<32x32xbf16>, vector<32x128xbf16>, vector<32x128xf32> -> vector<32x128xf32>
    %121 = arith.truncf %120 : vector<32x128xf32> to vector<32x128xbf16>
    %122 = vector.extract_strided_slice %81 {offsets = [0, 128], sizes = [32, 128], strides = [1, 1]} : vector<32x256xf32> to vector<32x128xf32>
    %123 = vector.extract_strided_slice %17 {offsets = [0, 128], sizes = [32, 128], strides = [1, 1]} : vector<32x256xf32> to vector<32x128xf32>
    %124 = vector.extract_strided_slice %18 {offsets = [0, 128], sizes = [32, 128], strides = [1, 1]} : vector<32x256xf32> to vector<32x128xf32>
    %125 = arith.mulf %122, %122 : vector<32x128xf32>
    %cst_70 = arith.constant dense<0.000000e+00> : vector<32xf32>
    %126 = vector.multi_reduction <add>, %125, %cst_70 [1] : vector<32x128xf32> to vector<32xf32>
    %127 = vector.shape_cast %126 : vector<32xf32> to vector<32x1xf32>
    %cst_71 = arith.constant 1.000000e-24 : f32
    %128 = vector.broadcast %cst_71 : f32 to vector<32x1xf32>
    %129 = arith.maximumf %127, %128 : vector<32x1xf32>
    %130 = math.rsqrt %129 : vector<32x1xf32>
    %131 = arith.mulf %123, %123 : vector<32x128xf32>
    %cst_72 = arith.constant dense<0.000000e+00> : vector<32xf32>
    %132 = vector.multi_reduction <add>, %131, %cst_72 [1] : vector<32x128xf32> to vector<32xf32>
    %133 = vector.shape_cast %132 : vector<32xf32> to vector<32x1xf32>
    %cst_73 = arith.constant 1.000000e-24 : f32
    %134 = vector.broadcast %cst_73 : f32 to vector<32x1xf32>
    %135 = arith.maximumf %133, %134 : vector<32x1xf32>
    %136 = math.rsqrt %135 : vector<32x1xf32>
    %137 = arith.mulf %130, %83 : vector<32x1xf32>
    %138 = vector.broadcast %137 : vector<32x1xf32> to vector<32x128xf32>
    %139 = arith.mulf %122, %138 : vector<32x128xf32>
    %140 = arith.truncf %139 : vector<32x128xf32> to vector<32x128xbf16>
    %141 = vector.broadcast %136 : vector<32x1xf32> to vector<32x128xf32>
    %142 = arith.mulf %123, %141 : vector<32x128xf32>
    %143 = arith.truncf %142 : vector<32x128xf32> to vector<32x128xbf16>
    %cst_74 = arith.constant dense<0.000000e+00> : vector<32x32xf32>
    %144 = tpu.matmul %140, %143, %cst_74 {dimension_numbers = #tpu.dot_dimension_numbers<[1], [1], [0], [0], [0, 0, 1, 0], [], []>} : vector<32x128xbf16>, vector<32x128xbf16>, vector<32x32xf32> -> vector<32x32xf32>
    %cst_75 = arith.constant dense<0xFF800000> : vector<32xf32>
    %145 = vector.multi_reduction <maximumf>, %144, %cst_75 [1] : vector<32x32xf32> to vector<32xf32>
    %146 = vector.shape_cast %145 : vector<32xf32> to vector<32x1xf32>
    %147 = vector.broadcast %146 : vector<32x1xf32> to vector<32x32xf32>
    %148 = arith.subf %144, %147 : vector<32x32xf32>
    %149 = math.exp %148 : vector<32x32xf32>
    %150 = arith.mulf %149, %82 : vector<32x32xf32>
    %cst_76 = arith.constant dense<0.000000e+00> : vector<32xf32>
    %151 = vector.multi_reduction <add>, %150, %cst_76 [1] : vector<32x32xf32> to vector<32xf32>
    %152 = vector.shape_cast %151 : vector<32xf32> to vector<32x1xf32>
    %153 = tpu.reciprocal %152 {approx = true} : vector<32x1xf32> -> vector<32x1xf32>
    %154 = vector.broadcast %153 : vector<32x1xf32> to vector<32x32xf32>
    %155 = arith.mulf %150, %154 : vector<32x32xf32>
    %156 = arith.truncf %155 : vector<32x32xf32> to vector<32x32xbf16>
    %157 = arith.truncf %124 : vector<32x128xf32> to vector<32x128xbf16>
    %cst_77 = arith.constant dense<0.000000e+00> : vector<32x128xf32>
    %158 = tpu.matmul %156, %157, %cst_77 {dimension_numbers = #tpu.dot_dimension_numbers<[1], [0], [0], [1], [0, 0, 1, 1], [], []>} : vector<32x32xbf16>, vector<32x128xbf16>, vector<32x128xf32> -> vector<32x128xf32>
    %159 = arith.truncf %158 : vector<32x128xf32> to vector<32x128xbf16>
    %160 = tpu.concatenate %121, %159 in 1 : vector<32x128xbf16>, vector<32x128xbf16> -> vector<32x256xbf16>
    %c0_78 = arith.constant 0 : index
    %c0_79 = arith.constant 0 : index
    %161 = vector.load %arg8[%c0_78, %c0_79] : memref<32x32xbf16, #tpu.memory_space<vmem>>, vector<32x32xbf16>
    %cst_80 = arith.constant dense<0.000000e+00> : vector<32x256xf32>
    %162 = tpu.matmul %161, %160, %cst_80 {dimension_numbers = #tpu.dot_dimension_numbers<[1], [0], [0], [1], [0, 0, 1, 1], [], []>} : vector<32x32xbf16>, vector<32x256xbf16>, vector<32x256xf32> -> vector<32x256xf32>
    %c0_81 = arith.constant 0 : index
    %c0_82 = arith.constant 0 : index
    %163 = vector.load %arg9[%c0_81, %c0_82] : memref<32x1xf32, #tpu.memory_space<vmem>>, vector<32x1xf32>
    %164 = vector.broadcast %163 : vector<32x1xf32> to vector<32x256xf32>
    %165 = arith.addf %162, %164 : vector<32x256xf32>
    %166 = vector.extract_strided_slice %165 {offsets = [0, 0], sizes = [32, 48], strides = [1, 1]} : vector<32x256xf32> to vector<32x48xf32>
    %c0_83 = arith.constant 0 : index
    %c0_84 = arith.constant 0 : index
    %167 = vector.load %arg13[%c0_83, %c0_84] : memref<64x48xf32, #tpu.memory_space<vmem>>, vector<32x48xf32>
    tpu.vector_store %arg13[%c0_83, %c0_84], %166 {strides = array<i32>} : memref<64x48xf32, #tpu.memory_space<vmem>>, vector<32x48xf32>,
    %168 = vector.extract_strided_slice %165 {offsets = [0, 128], sizes = [32, 48], strides = [1, 1]} : vector<32x256xf32> to vector<32x48xf32>
    %c32_85 = arith.constant 32 : index
    %c0_86 = arith.constant 0 : index
    %169 = vector.load %arg13[%c32_85, %c0_86] : memref<64x48xf32, #tpu.memory_space<vmem>>, vector<32x48xf32>
    tpu.vector_store %arg13[%c32_85, %c0_86], %168 {strides = array<i32>} : memref<64x48xf32, #tpu.memory_space<vmem>>, vector<32x48xf32>,
    return
  }
  func.func @transform_0(%arg0: i32) -> (i32, i32) {
    %c0_i32 = arith.constant 0 : i32
    %c0_i32_0 = arith.constant 0 : i32
    return %arg0, %c0_i32 : i32, i32
  }
  func.func @transform_1(%arg0: i32) -> (i32, i32) {
    %c0_i32 = arith.constant 0 : i32
    %c0_i32_0 = arith.constant 0 : i32
    return %arg0, %c0_i32 : i32, i32
  }
  func.func @transform_2(%arg0: i32) -> (i32, i32) {
    %c0_i32 = arith.constant 0 : i32
    %c0_i32_0 = arith.constant 0 : i32
    %c0_i32_1 = arith.constant 0 : i32
    return %c0_i32, %c0_i32_0 : i32, i32
  }
  func.func @transform_3(%arg0: i32) -> (i32, i32) {
    %c0_i32 = arith.constant 0 : i32
    %c0_i32_0 = arith.constant 0 : i32
    %c0_i32_1 = arith.constant 0 : i32
    return %c0_i32, %c0_i32_0 : i32, i32
  }
  func.func @transform_4(%arg0: i32) -> (i32, i32) {
    %c0_i32 = arith.constant 0 : i32
    %c0_i32_0 = arith.constant 0 : i32
    %c0_i32_1 = arith.constant 0 : i32
    return %c0_i32, %c0_i32_0 : i32, i32
  }
  func.func @transform_5(%arg0: i32) -> (i32, i32) {
    %c0_i32 = arith.constant 0 : i32
    %c0_i32_0 = arith.constant 0 : i32
    %c0_i32_1 = arith.constant 0 : i32
    return %c0_i32, %c0_i32_0 : i32, i32
  }
  func.func @transform_6(%arg0: i32) -> (i32, i32) {
    %c0_i32 = arith.constant 0 : i32
    %c0_i32_0 = arith.constant 0 : i32
    %c0_i32_1 = arith.constant 0 : i32
    return %c0_i32, %c0_i32_0 : i32, i32
  }
  func.func @transform_7(%arg0: i32) -> (i32, i32) {
    %c0_i32 = arith.constant 0 : i32
    %c0_i32_0 = arith.constant 0 : i32
    %c0_i32_1 = arith.constant 0 : i32
    return %c0_i32, %c0_i32_0 : i32, i32
  }
  func.func @transform_8(%arg0: i32) -> (i32, i32) {
    %c0_i32 = arith.constant 0 : i32
    %c0_i32_0 = arith.constant 0 : i32
    %c0_i32_1 = arith.constant 0 : i32
    return %c0_i32, %c0_i32_0 : i32, i32
  }
  func.func @transform_9(%arg0: i32) -> (i32, i32) {
    %c0_i32 = arith.constant 0 : i32
    %c0_i32_0 = arith.constant 0 : i32
    %c0_i32_1 = arith.constant 0 : i32
    return %c0_i32, %c0_i32_0 : i32, i32
  }
  func.func @transform_10(%arg0: i32) -> (i32, i32) {
    %c0_i32 = arith.constant 0 : i32
    %c0_i32_0 = arith.constant 0 : i32
    %c0_i32_1 = arith.constant 0 : i32
    return %c0_i32, %c0_i32_0 : i32, i32
  }
  func.func @transform_11(%arg0: i32) -> (i32, i32) {
    %c0_i32 = arith.constant 0 : i32
    %c0_i32_0 = arith.constant 0 : i32
    %c0_i32_1 = arith.constant 0 : i32
    return %c0_i32, %c0_i32_0 : i32, i32
  }
  func.func @transform_12(%arg0: i32) -> (i32, i32) {
    %c0_i32 = arith.constant 0 : i32
    %c0_i32_0 = arith.constant 0 : i32
    return %arg0, %c0_i32 : i32, i32
  }
}

</mosaic_0001>

<llo_original>
// kernel: attention1_forward.1
$region0: #{attention1_forward.1}
  #allocation0 [shape = 'u32[]', space=smem, size = 0x4, offset = 0x4, fixed_abs, tag = 'smem constant byte address 0x4 - core index']
  #allocation1 [shape = 'u32[72,128]{1,0:T(1,128)}', space=vmem, size = 0x9000, scoped, tag = 'internal scratch']
  #allocation2 [shape = 'bf16[32,256]{1,0:T(8,128)(2,1)}', space=vmem, size = 0x4000, scoped, tag = 'scratch operand']
  #allocation3 [shape = 'bf16[288,256]{1,0:T(8,128)(2,1)}', space=vmem, size = 0x24000, scoped, tag = 'scratch operand']
  %s0 = inlined_call_operand.vmem [shape: f32[128,48], index: 0, kind: input, shape index: {}]
  %s1 = inlined_call_operand.vmem [shape: f32[128,64], index: 1, kind: input, shape index: {}]
  %s2 = inlined_call_operand.vmem [shape: bf16[64,32], index: 2, kind: input, shape index: {}]
  %s3 = inlined_call_operand.vmem [shape: f32[64,1], index: 3, kind: input, shape index: {}]
  %s4 = inlined_call_operand.vmem [shape: bf16[32,288], index: 4, kind: input, shape index: {}]
  %s5 = inlined_call_operand.vmem [shape: bf16[64,1152], index: 5, kind: input, shape index: {}]
  %s6 = inlined_call_operand.vmem [shape: f32[32,256], index: 6, kind: input, shape index: {}]
  %s7 = inlined_call_operand.vmem [shape: bf16[32,32], index: 7, kind: input, shape index: {}]
  %s8 = inlined_call_operand.vmem [shape: f32[32,1], index: 8, kind: input, shape index: {}]
  %s9 = inlined_call_operand.vmem [shape: f32[32,1], index: 9, kind: input, shape index: {}]
  %s10 = inlined_call_operand.vmem [shape: f32[32,32], index: 10, kind: input, shape index: {}]
  %s11 = inlined_call_operand.vmem [shape: f32[1,256], index: 11, kind: input, shape index: {}]
  %s12 = inlined_call_operand.hbm [shape: f32[128,48], index: 12, kind: output, shape index: {}]
  %s13 = sld [smem:[#allocation0]]
  $region81: #{attention1_forward.1} parent=0
    _
  %s15 = ssub.s32 1, %s13
  %s16 = scalar_select 0, %s15, %s13
  $region1: #{attention1_forward.1} parent=0
    #allocation4 [shape = 'u8[65536]{0}', space=vmem, size = 0x10000, scoped, tag = 'output window, operand 0']
    #allocation5 [shape = 's32[2]{0}', space=sflag, size = 0x8, scoped, tag = 'scoped memory for attention1_forward.1']
    %17 = vsyncpa [#allocation5], 0
    %s18 = scalar_lea.sflag [#allocation5], 1
    %19 = vsyncpa %s18, 0
    loop: start=0, step=1, limit=4
    $region2: #{attention1_forward.1} parent=1 // loop_pre_header
      _
    $region3: #{attention1_forward.1} parent=1 // loop_header
      %s21 = sphi 0, %s25
      %p22 = scmp.ge.s32.totalorder %s21, 4
      %s31 = sphi 0, %s33
      %s34 = sphi 0, %s31
      %s35 = sphi 0, %s34
      %s51 = sphi 0, %s35
      %s57 = sphi 0, %s59
      %s60 = sphi 0, %s57
      %s61 = sphi 0, %s60
      %s77 = sphi 0, %s61
      %s81 = sphi 0, %s81
      %s83 = sphi 0, %s81
      %s84 = sphi 0, %s83
      %s98 = sphi 0, %s84
      %s102 = sphi 0, %s102
      %s104 = sphi 0, %s102
      %s105 = sphi 0, %s104
      %s119 = sphi 0, %s105
      %s123 = sphi 0, %s123
      %s125 = sphi 0, %s123
      %s126 = sphi 0, %s125
      %s140 = sphi 0, %s126
      %s144 = sphi 0, %s144
      %s146 = sphi 0, %s144
      %s147 = sphi 0, %s146
      %s161 = sphi 0, %s147
      %s165 = sphi 0, %s165
      %s167 = sphi 0, %s165
      %s168 = sphi 0, %s167
      %s182 = sphi 0, %s168
      %s186 = sphi 0, %s186
      %s188 = sphi 0, %s186
      %s189 = sphi 0, %s188
      %s203 = sphi 0, %s189
      %s207 = sphi 0, %s207
      %s209 = sphi 0, %s207
      %s210 = sphi 0, %s209
      %s224 = sphi 0, %s210
      %s228 = sphi 0, %s228
      %s230 = sphi 0, %s228
      %s231 = sphi 0, %s230
      %s245 = sphi 0, %s231
      %s249 = sphi 0, %s249
      %s251 = sphi 0, %s249
      %s252 = sphi 0, %s251
      %s266 = sphi 0, %s252
      %s270 = sphi 0, %s270
      %s272 = sphi 0, %s270
      %s273 = sphi 0, %s272
      %s287 = sphi 0, %s273
      %s293 = sphi 0, %s295
      %s296 = sphi 0, %s293
      %s297 = sphi 0, %s296
      %s313 = sphi 0, %s297
    $region4: #{attention1_forward.1} parent=1 // loop_header_branch
      %24 = sbr.rel (%p22) target = $region8
    $region5: #{attention1_forward.1} parent=1 // loop_body
      %s26 = ssub.s32 %s21, 1
      %s27 = ssub.s32 %s21, 2
      %s28 = sadd.s32 %s21, 1
      %s29 = ssub.s32 %s21, %s28
      %p30 = scmp.eq.s32.totalorder %s29, 0
      %s32 = sadd.s32 %s31, 1
      %s33 = scalar_select %p30, %s31, %s32
      %p36 = pneg %p30
      %p37 = scmp.eq.s32.totalorder %s21, 1
      %p38 = por %p36, %p37
      %p39 = scmp.ne.s32.totalorder %s31, %s34
      %p40 = scmp.eq.s32.totalorder %s21, 0
      %p41 = por %p39, %p40
      %p42 = scmp.ne.s32.totalorder %s31, %s34
      %p43 = scmp.eq.s32.totalorder %s26, 1
      %p44 = por %p42, %p43
      %p45 = scmp.ne.s32.totalorder %s34, %s35
      %p46 = scmp.eq.s32.totalorder %s26, 0
      %p47 = por %p45, %p46
      %p48 = scmp.ne.s32.totalorder %s34, %s35
      %p49 = scmp.eq.s32.totalorder %s27, 1
      %p50 = por %p48, %p49
      %p52 = scmp.ne.s32.totalorder %s35, %s51
      %p53 = scmp.eq.s32.totalorder %s27, 0
      %p54 = por %p52, %p53
      %s55 = ssub.s32 %s21, %s28
      %p56 = scmp.eq.s32.totalorder %s55, 0
      %s58 = sadd.s32 %s57, 1
      %s59 = scalar_select %p56, %s57, %s58
      %p62 = pneg %p56
      %p63 = scmp.eq.s32.totalorder %s21, 1
      %p64 = por %p62, %p63
      %p65 = scmp.ne.s32.totalorder %s57, %s60
      %p66 = scmp.eq.s32.totalorder %s21, 0
      %p67 = por %p65, %p66
      %p68 = scmp.ne.s32.totalorder %s57, %s60
      %p69 = scmp.eq.s32.totalorder %s26, 1
      %p70 = por %p68, %p69
      %p71 = scmp.ne.s32.totalorder %s60, %s61
      %p72 = scmp.eq.s32.totalorder %s26, 0
      %p73 = por %p71, %p72
      %p74 = scmp.ne.s32.totalorder %s60, %s61
      %p75 = scmp.eq.s32.totalorder %s27, 1
      %p76 = por %p74, %p75
      %p78 = scmp.ne.s32.totalorder %s61, %s77
      %p79 = scmp.eq.s32.totalorder %s27, 0
      %p80 = por %p78, %p79
      %s82 = sadd.s32 %s81, 1
      %p85 = scmp.eq.s32.totalorder %s21, 1
      %p86 = scmp.ne.s32.totalorder %s81, %s83
      %p87 = scmp.eq.s32.totalorder %s21, 0
      %p88 = por %p86, %p87
      %p89 = scmp.ne.s32.totalorder %s81, %s83
      %p90 = scmp.eq.s32.totalorder %s26, 1
      %p91 = por %p89, %p90
      %p92 = scmp.ne.s32.totalorder %s83, %s84
      %p93 = scmp.eq.s32.totalorder %s26, 0
      %p94 = por %p92, %p93
      %p95 = scmp.ne.s32.totalorder %s83, %s84
      %p96 = scmp.eq.s32.totalorder %s27, 1
      %p97 = por %p95, %p96
      %p99 = scmp.ne.s32.totalorder %s84, %s98
      %p100 = scmp.eq.s32.totalorder %s27, 0
      %p101 = por %p99, %p100
      %s103 = sadd.s32 %s102, 1
      %p106 = scmp.eq.s32.totalorder %s21, 1
      %p107 = scmp.ne.s32.totalorder %s102, %s104
      %p108 = scmp.eq.s32.totalorder %s21, 0
      %p109 = por %p107, %p108
      %p110 = scmp.ne.s32.totalorder %s102, %s104
      %p111 = scmp.eq.s32.totalorder %s26, 1
      %p112 = por %p110, %p111
      %p113 = scmp.ne.s32.totalorder %s104, %s105
      %p114 = scmp.eq.s32.totalorder %s26, 0
      %p115 = por %p113, %p114
      %p116 = scmp.ne.s32.totalorder %s104, %s105
      %p117 = scmp.eq.s32.totalorder %s27, 1
      %p118 = por %p116, %p117
      %p120 = scmp.ne.s32.totalorder %s105, %s119
      %p121 = scmp.eq.s32.totalorder %s27, 0
      %p122 = por %p120, %p121
      %s124 = sadd.s32 %s123, 1
      %p127 = scmp.eq.s32.totalorder %s21, 1
      %p128 = scmp.ne.s32.totalorder %s123, %s125
      %p129 = scmp.eq.s32.totalorder %s21, 0
      %p130 = por %p128, %p129
      %p131 = scmp.ne.s32.totalorder %s123, %s125
      %p132 = scmp.eq.s32.totalorder %s26, 1
      %p133 = por %p131, %p132
      %p134 = scmp.ne.s32.totalorder %s125, %s126
      %p135 = scmp.eq.s32.totalorder %s26, 0
      %p136 = por %p134, %p135
      %p137 = scmp.ne.s32.totalorder %s125, %s126
      %p138 = scmp.eq.s32.totalorder %s27, 1
      %p139 = por %p137, %p138
      %p141 = scmp.ne.s32.totalorder %s126, %s140
      %p142 = scmp.eq.s32.totalorder %s27, 0
      %p143 = por %p141, %p142
      %s145 = sadd.s32 %s144, 1
      %p148 = scmp.eq.s32.totalorder %s21, 1
      %p149 = scmp.ne.s32.totalorder %s144, %s146
      %p150 = scmp.eq.s32.totalorder %s21, 0
      %p151 = por %p149, %p150
      %p152 = scmp.ne.s32.totalorder %s144, %s146
      %p153 = scmp.eq.s32.totalorder %s26, 1
      %p154 = por %p152, %p153
      %p155 = scmp.ne.s32.totalorder %s146, %s147
      %p156 = scmp.eq.s32.totalorder %s26, 0
      %p157 = por %p155, %p156
      %p158 = scmp.ne.s32.totalorder %s146, %s147
      %p159 = scmp.eq.s32.totalorder %s27, 1
      %p160 = por %p158, %p159
      %p162 = scmp.ne.s32.totalorder %s147, %s161
      %p163 = scmp.eq.s32.totalorder %s27, 0
      %p164 = por %p162, %p163
      %s166 = sadd.s32 %s165, 1
      %p169 = scmp.eq.s32.totalorder %s21, 1
      %p170 = scmp.ne.s32.totalorder %s165, %s167
      %p171 = scmp.eq.s32.totalorder %s21, 0
      %p172 = por %p170, %p171
      %p173 = scmp.ne.s32.totalorder %s165, %s167
      %p174 = scmp.eq.s32.totalorder %s26, 1
      %p175 = por %p173, %p174
      %p176 = scmp.ne.s32.totalorder %s167, %s168
      %p177 = scmp.eq.s32.totalorder %s26, 0
      %p178 = por %p176, %p177
      %p179 = scmp.ne.s32.totalorder %s167, %s168
      %p180 = scmp.eq.s32.totalorder %s27, 1
      %p181 = por %p179, %p180
      %p183 = scmp.ne.s32.totalorder %s168, %s182
      %p184 = scmp.eq.s32.totalorder %s27, 0
      %p185 = por %p183, %p184
      %s187 = sadd.s32 %s186, 1
      %p190 = scmp.eq.s32.totalorder %s21, 1
      %p191 = scmp.ne.s32.totalorder %s186, %s188
      %p192 = scmp.eq.s32.totalorder %s21, 0
      %p193 = por %p191, %p192
      %p194 = scmp.ne.s32.totalorder %s186, %s188
      %p195 = scmp.eq.s32.totalorder %s26, 1
      %p196 = por %p194, %p195
      %p197 = scmp.ne.s32.totalorder %s188, %s189
      %p198 = scmp.eq.s32.totalorder %s26, 0
      %p199 = por %p197, %p198
      %p200 = scmp.ne.s32.totalorder %s188, %s189
      %p201 = scmp.eq.s32.totalorder %s27, 1
      %p202 = por %p200, %p201
      %p204 = scmp.ne.s32.totalorder %s189, %s203
      %p205 = scmp.eq.s32.totalorder %s27, 0
      %p206 = por %p204, %p205
      %s208 = sadd.s32 %s207, 1
      %p211 = scmp.eq.s32.totalorder %s21, 1
      %p212 = scmp.ne.s32.totalorder %s207, %s209
      %p213 = scmp.eq.s32.totalorder %s21, 0
      %p214 = por %p212, %p213
      %p215 = scmp.ne.s32.totalorder %s207, %s209
      %p216 = scmp.eq.s32.totalorder %s26, 1
      %p217 = por %p215, %p216
      %p218 = scmp.ne.s32.totalorder %s209, %s210
      %p219 = scmp.eq.s32.totalorder %s26, 0
      %p220 = por %p218, %p219
      %p221 = scmp.ne.s32.totalorder %s209, %s210
      %p222 = scmp.eq.s32.totalorder %s27, 1
      %p223 = por %p221, %p222
      %p225 = scmp.ne.s32.totalorder %s210, %s224
      %p226 = scmp.eq.s32.totalorder %s27, 0
      %p227 = por %p225, %p226
      %s229 = sadd.s32 %s228, 1
      %p232 = scmp.eq.s32.totalorder %s21, 1
      %p233 = scmp.ne.s32.totalorder %s228, %s230
      %p234 = scmp.eq.s32.totalorder %s21, 0
      %p235 = por %p233, %p234
      %p236 = scmp.ne.s32.totalorder %s228, %s230
      %p237 = scmp.eq.s32.totalorder %s26, 1
      %p238 = por %p236, %p237
      %p239 = scmp.ne.s32.totalorder %s230, %s231
      %p240 = scmp.eq.s32.totalorder %s26, 0
      %p241 = por %p239, %p240
      %p242 = scmp.ne.s32.totalorder %s230, %s231
      %p243 = scmp.eq.s32.totalorder %s27, 1
      %p244 = por %p242, %p243
      %p246 = scmp.ne.s32.totalorder %s231, %s245
      %p247 = scmp.eq.s32.totalorder %s27, 0
      %p248 = por %p246, %p247
      %s250 = sadd.s32 %s249, 1
      %p253 = scmp.eq.s32.totalorder %s21, 1
      %p254 = scmp.ne.s32.totalorder %s249, %s251
      %p255 = scmp.eq.s32.totalorder %s21, 0
      %p256 = por %p254, %p255
      %p257 = scmp.ne.s32.totalorder %s249, %s251
      %p258 = scmp.eq.s32.totalorder %s26, 1
      %p259 = por %p257, %p258
      %p260 = scmp.ne.s32.totalorder %s251, %s252
      %p261 = scmp.eq.s32.totalorder %s26, 0
      %p262 = por %p260, %p261
      %p263 = scmp.ne.s32.totalorder %s251, %s252
      %p264 = scmp.eq.s32.totalorder %s27, 1
      %p265 = por %p263, %p264
      %p267 = scmp.ne.s32.totalorder %s252, %s266
      %p268 = scmp.eq.s32.totalorder %s27, 0
      %p269 = por %p267, %p268
      %s271 = sadd.s32 %s270, 1
      %p274 = scmp.eq.s32.totalorder %s21, 1
      %p275 = scmp.ne.s32.totalorder %s270, %s272
      %p276 = scmp.eq.s32.totalorder %s21, 0
      %p277 = por %p275, %p276
      %p278 = scmp.ne.s32.totalorder %s270, %s272
      %p279 = scmp.eq.s32.totalorder %s26, 1
      %p280 = por %p278, %p279
      %p281 = scmp.ne.s32.totalorder %s272, %s273
      %p282 = scmp.eq.s32.totalorder %s26, 0
      %p283 = por %p281, %p282
      %p284 = scmp.ne.s32.totalorder %s272, %s273
      %p285 = scmp.eq.s32.totalorder %s27, 1
      %p286 = por %p284, %p285
      %p288 = scmp.ne.s32.totalorder %s273, %s287
      %p289 = scmp.eq.s32.totalorder %s27, 0
      %p290 = por %p288, %p289
      %s291 = ssub.s32 %s21, %s28
      %p292 = scmp.eq.s32.totalorder %s291, 0
      %s294 = sadd.s32 %s293, 1
      %s295 = scalar_select %p292, %s293, %s294
      %p298 = pneg %p292
      %p299 = scmp.eq.s32.totalorder %s21, 1
      %p300 = por %p298, %p299
      %p301 = scmp.ne.s32.totalorder %s293, %s296
      %p302 = scmp.eq.s32.totalorder %s21, 0
      %p303 = por %p301, %p302
      %p304 = scmp.ne.s32.totalorder %s293, %s296
      %p305 = scmp.eq.s32.totalorder %s26, 1
      %p306 = por %p304, %p305
      %p307 = scmp.ne.s32.totalorder %s296, %s297
      %p308 = scmp.eq.s32.totalorder %s26, 0
      %p309 = por %p307, %p308
      %p310 = scmp.ne.s32.totalorder %s296, %s297
      %p311 = scmp.eq.s32.totalorder %s27, 1
      %p312 = por %p310, %p311
      %p314 = scmp.ne.s32.totalorder %s297, %s313
      %p315 = scmp.eq.s32.totalorder %s27, 0
      %p316 = por %p314, %p315
      %p317 = scmp.le.s32.totalorder 1, %s21
      %p318 = scmp.lt.s32.totalorder %s21, 3
      %p319 = pnand %p317, %p318
      %p320 = pneg %p319
      // Predicated region
      $region9: #{attention1_forward.1} parent=5 // pred_check
        _
      $region10: #{attention1_forward.1} parent=5 // pred_check_branch
        %322 = sbr.rel (%p319) target = $region12
      $region11: #{attention1_forward.1} parent=5 // pred_region
        %s323 = ssub.s32 %s21, 1
        // Predicated region
        $region13: #{attention1_forward.1} parent=11 // pred_check
          %p324 = pneg %p94
        $region14: #{attention1_forward.1} parent=11 // pred_check_branch
          %326 = sbr.rel (%p324) target = $region16
        $region15: #{attention1_forward.1} parent=11 // pred_region
          _
        $region16: #{attention1_forward.1} parent=11 // pred_fallthru
          _
        // Predicated region
        $region17: #{attention1_forward.1} parent=11 // pred_check
          %p327 = pneg %p115
        $region18: #{attention1_forward.1} parent=11 // pred_check_branch
          %329 = sbr.rel (%p327) target = $region20
        $region19: #{attention1_forward.1} parent=11 // pred_region
          _
        $region20: #{attention1_forward.1} parent=11 // pred_fallthru
          _
        // Predicated region
        $region21: #{attention1_forward.1} parent=11 // pred_check
          %p330 = pneg %p136
        $region22: #{attention1_forward.1} parent=11 // pred_check_branch
          %332 = sbr.rel (%p330) target = $region24
        $region23: #{attention1_forward.1} parent=11 // pred_region
          _
        $region24: #{attention1_forward.1} parent=11 // pred_fallthru
          _
        // Predicated region
        $region25: #{attention1_forward.1} parent=11 // pred_check
          %p333 = pneg %p157
        $region26: #{attention1_forward.1} parent=11 // pred_check_branch
          %335 = sbr.rel (%p333) target = $region28
        $region27: #{attention1_forward.1} parent=11 // pred_region
          _
        $region28: #{attention1_forward.1} parent=11 // pred_fallthru
          _
        // Predicated region
        $region29: #{attention1_forward.1} parent=11 // pred_check
          %p336 = pneg %p178
        $region30: #{attention1_forward.1} parent=11 // pred_check_branch
          %338 = sbr.rel (%p336) target = $region32
        $region31: #{attention1_forward.1} parent=11 // pred_region
          _
        $region32: #{attention1_forward.1} parent=11 // pred_fallthru
          _
        // Predicated region
        $region33: #{attention1_forward.1} parent=11 // pred_check
          %p339 = pneg %p199
        $region34: #{attention1_forward.1} parent=11 // pred_check_branch
          %341 = sbr.rel (%p339) target = $region36
        $region35: #{attention1_forward.1} parent=11 // pred_region
          _
        $region36: #{attention1_forward.1} parent=11 // pred_fallthru
          _
        // Predicated region
        $region37: #{attention1_forward.1} parent=11 // pred_check
          %p342 = pneg %p220
        $region38: #{attention1_forward.1} parent=11 // pred_check_branch
          %344 = sbr.rel (%p342) target = $region40
        $region39: #{attention1_forward.1} parent=11 // pred_region
          _
        $region40: #{attention1_forward.1} parent=11 // pred_fallthru
          _
        // Predicated region
        $region41: #{attention1_forward.1} parent=11 // pred_check
          %p345 = pneg %p241
        $region42: #{attention1_forward.1} parent=11 // pred_check_branch
          %347 = sbr.rel (%p345) target = $region44
        $region43: #{attention1_forward.1} parent=11 // pred_region
          _
        $region44: #{attention1_forward.1} parent=11 // pred_fallthru
          _
        // Predicated region
        $region45: #{attention1_forward.1} parent=11 // pred_check
          %p348 = pneg %p262
        $region46: #{attention1_forward.1} parent=11 // pred_check_branch
          %350 = sbr.rel (%p348) target = $region48
        $region47: #{attention1_forward.1} parent=11 // pred_region
          _
        $region48: #{attention1_forward.1} parent=11 // pred_fallthru
          _
        // Predicated region
        $region49: #{attention1_forward.1} parent=11 // pred_check
          %p351 = pneg %p283
        $region50: #{attention1_forward.1} parent=11 // pred_check_branch
          %353 = sbr.rel (%p351) target = $region52
        $region51: #{attention1_forward.1} parent=11 // pred_region
          _
        $region52: #{attention1_forward.1} parent=11 // pred_fallthru
          _
      $region12: #{attention1_forward.1} parent=5 // pred_fallthru
        _
      %p354 = scmp.lt.s32.totalorder %s21, 2
      // Predicated region
      $region53: #{attention1_forward.1} parent=5 // pred_check
        %p355 = pneg %p354
      $region54: #{attention1_forward.1} parent=5 // pred_check_branch
        %357 = sbr.rel (%p355) target = $region56
      $region55: #{attention1_forward.1} parent=5 // pred_region
        // Predicated region
        $region57: #{attention1_forward.1} parent=55 // pred_check
          %p358 = pneg %p41
        $region58: #{attention1_forward.1} parent=55 // pred_check_branch
          %360 = sbr.rel (%p358) target = $region60
        $region59: #{attention1_forward.1} parent=55 // pred_region
          %s361 = smul.u32 8, %s21
          %p362 = scmp.lt.s32.totalorder %s361, 15
          %s363 = scalar_select %p362, %s361, 15
          %s364 = smul.addr %s363, 8
          %s365 = scalar_lea.vmem %s0, %s364
          %s366 = smul.u32 8, %s21
        $region60: #{attention1_forward.1} parent=55 // pred_fallthru
          _
        // Predicated region
        $region61: #{attention1_forward.1} parent=55 // pred_check
          %p367 = pneg %p67
        $region62: #{attention1_forward.1} parent=55 // pred_check_branch
          %369 = sbr.rel (%p367) target = $region64
        $region63: #{attention1_forward.1} parent=55 // pred_region
          %s370 = smul.u32 8, %s21
          %p371 = scmp.lt.s32.totalorder %s370, 15
          %s372 = scalar_select %p371, %s370, 15
          %s373 = smul.addr %s372, 8
          %s374 = scalar_lea.vmem %s1, %s373
          %s375 = smul.u32 8, %s21
        $region64: #{attention1_forward.1} parent=55 // pred_fallthru
          _
      $region56: #{attention1_forward.1} parent=5 // pred_fallthru
        _
      %p376 = scmp.le.s32.totalorder 1, %s21
      %p377 = scmp.lt.s32.totalorder %s21, 3
      %p378 = pnand %p376, %p377
      %p379 = pneg %p378
      // Predicated region
      $region65: #{attention1_forward.1} parent=5 // pred_check
        _
      $region66: #{attention1_forward.1} parent=5 // pred_check_branch
        %381 = sbr.rel (%p378) target = $region68
      $region67: #{attention1_forward.1} parent=5 // pred_region
        %s382 = ssub.s32 %s21, 1
        %s383 = smul.u32 8, %s26
        %p384 = scmp.lt.s32.totalorder %s383, 15
        %s385 = scalar_select %p384, %s383, 15
        %s386 = smul.addr %s385, 8
        %s387 = scalar_lea.vmem %s0, %s386
        %p388 = pneg %p47
        %p389 = pneg %p44
        %s390 = smul.u32 8, %s26
        %p391 = scmp.lt.s32.totalorder %s390, 15
        %s392 = scalar_select %p391, %s390, 15
        %s393 = smul.addr %s392, 8
        %s394 = scalar_lea.vmem %s1, %s393
        %p395 = pneg %p73
        %p396 = pneg %p70
        %p397 = pneg %p94
        %p398 = pneg %p91
        %p399 = pneg %p115
        %p400 = pneg %p112
        %p401 = pneg %p136
        %p402 = pneg %p133
        %p403 = pneg %p157
        %p404 = pneg %p154
        %p405 = pneg %p178
        %p406 = pneg %p175
        %p407 = pneg %p199
        %p408 = pneg %p196
        %p409 = pneg %p220
        %p410 = pneg %p217
        %p411 = pneg %p241
        %p412 = pneg %p238
        %p413 = pneg %p262
        %p414 = pneg %p259
        %p415 = pneg %p283
        %p416 = pneg %p280
        %p417 = pneg %p309
        %p418 = pneg %p306
        %s419 = sand.u32 %s296, 1
        %s420 = scalar_lea.sflag [#allocation5], %s419
        %s421 = sand.u32 %s296, 1
        %s422 = smul.addr %s421, 64
        %s423 = scalar_lea.vmem [#allocation4], %s422
        %s424 = smul.u32 8, %s26
        %p425 = scmp.lt.s32.totalorder %s424, 15
        %s426 = scalar_select %p425, %s424, 15
        %s427 = smul.addr %s426, 8
        %s428 = scalar_lea.vmem %s0, %s427
        %s429 = smul.u32 8, %s26
        %s430 = smul.u32 8, %s26
        %p431 = scmp.lt.s32.totalorder %s430, 15
        %s432 = scalar_select %p431, %s430, 15
        %s433 = smul.addr %s432, 8
        %s434 = scalar_lea.vmem %s1, %s433
        %s435 = smul.u32 8, %s26
        %s436 = smul.u32 8, %s26
        %438 = vst [vmem:[#allocation2] sm:$0xff] 0
        %439 = vst [vmem:[#allocation2 + $0x8] sm:$0xff] 0
        %440 = vst [vmem:[#allocation2 + $0x10] sm:$0xff] 0
        %441 = vst [vmem:[#allocation2 + $0x18] sm:$0xff] 0
        %v442 = vld [vmem:[%s428] sm:$0xff]
        %v443 = vld [vmem:[%s428 + $0x8] sm:$0xff]
        %v444 = vld [vmem:[%s428 + $0x10] sm:$0xff]
        %v445 = vld [vmem:[%s428 + $0x18] sm:$0xff]
        %v446 = vpack.c.bf16 %v442, %v442
        %v447 = vpack.c.bf16 %v443, %v443
        %v448 = vpack.c.bf16 %v444, %v444
        %v449 = vpack.c.bf16 %v445, %v445
        %vm450 = vcmask 388096
        %451 = vst.msk [vmem:[#allocation2] sm:$0xf] %vm450, %v446
        %452 = vst.msk [vmem:[#allocation2 + $0x8] sm:$0xf] %vm450, %v447
        %453 = vst.msk [vmem:[#allocation2 + $0x10] sm:$0xf] %vm450, %v448
        %454 = vst.msk [vmem:[#allocation2 + $0x18] sm:$0xf] %vm450, %v449
        %v455 = vld [vmem:[%s428 + $0x20] sm:$0xff]
        %v456 = vld [vmem:[%s428 + $0x28] sm:$0xff]
        %v457 = vld [vmem:[%s428 + $0x30] sm:$0xff]
        %v458 = vld [vmem:[%s428 + $0x38] sm:$0xff]
        %v459 = vpack.c.bf16 %v455, %v455
        %v460 = vpack.c.bf16 %v456, %v456
        %v461 = vpack.c.bf16 %v457, %v457
        %v462 = vpack.c.bf16 %v458, %v458
        %463 = vst.msk [vmem:[#allocation2 + $0x4] sm:$0xf] %vm450, %v459
        %464 = vst.msk [vmem:[#allocation2 + $0xc] sm:$0xf] %vm450, %v460
        %465 = vst.msk [vmem:[#allocation2 + $0x14] sm:$0xf] %vm450, %v461
        %466 = vst.msk [vmem:[#allocation2 + $0x1c] sm:$0xf] %vm450, %v462
        %v467 = vld [vmem:[%s2] sm:$0xf]
        %v468 = vld [vmem:[%s2 + $0x4] sm:$0xf]
        %v469 = vld [vmem:[%s2 + $0x8] sm:$0xf]
        %v470 = vld [vmem:[%s2 + $0xc] sm:$0xf]
        %v471 = vld [vmem:[%s2 + $0x10] sm:$0xf]
        %v472 = vld [vmem:[%s2 + $0x14] sm:$0xf]
        %v473 = vld [vmem:[%s2 + $0x18] sm:$0xf]
        %v474 = vld [vmem:[%s2 + $0x1c] sm:$0xf]
        %v475 = vld [vmem:[#allocation2] sm:$0xff]
        %v476 = vld [vmem:[#allocation2 + $0x8] sm:$0xff]
        %v477 = vld [vmem:[#allocation2 + $0x10] sm:$0xff]
        %v478 = vld [vmem:[#allocation2 + $0x18] sm:$0xff]
        %v479 = vld [vmem:[%s3] sm:$0xff]
        %v480 = vld [vmem:[%s3 + $0x8] sm:$0xff]
        %v481 = vld [vmem:[%s3 + $0x10] sm:$0xff]
        %v482 = vld [vmem:[%s3 + $0x18] sm:$0xff]
        %v483 = vld [vmem:[%s3 + $0x20] sm:$0xff]
        %v484 = vld [vmem:[%s3 + $0x28] sm:$0xff]
        %v485 = vld [vmem:[%s3 + $0x30] sm:$0xff]
        %v486 = vld [vmem:[%s3 + $0x38] sm:$0xff]
        %488 = vset.pattern.permute.xlu0 0
        %489 = vperm.xlu0 %488, %v479
        %v490 = vpop.permute.xlu0 %489
        %493 = vset.pattern.permute.xlu0 0
        %494 = vperm.xlu0 %493, %v480
        %v495 = vpop.permute.xlu0 %494
        %498 = vset.pattern.permute.xlu0 0
        %499 = vperm.xlu0 %498, %v481
        %v500 = vpop.permute.xlu0 %499
        %503 = vset.pattern.permute.xlu0 0
        %504 = vperm.xlu0 %503, %v482
        %v505 = vpop.permute.xlu0 %504
        %508 = vset.pattern.permute.xlu0 0
        %509 = vperm.xlu0 %508, %v483
        %v510 = vpop.permute.xlu0 %509
        %513 = vset.pattern.permute.xlu0 0
        %514 = vperm.xlu0 %513, %v484
        %v515 = vpop.permute.xlu0 %514
        %518 = vset.pattern.permute.xlu0 0
        %519 = vperm.xlu0 %518, %v485
        %v520 = vpop.permute.xlu0 %519
        %523 = vset.pattern.permute.xlu0 0
        %524 = vperm.xlu0 %523, %v486
        %v525 = vpop.permute.xlu0 %524
        %v535 = vunpack.c.l.b16 %v467
        %v536 = vunpack.c.l.b16 %v468
        %v537 = vunpack.c.l.b16 %v469
        %v538 = vunpack.c.l.b16 %v470
        %v539 = vunpack.c.l.b16 %v471
        %v540 = vunpack.c.l.b16 %v472
        %v541 = vunpack.c.l.b16 %v473
        %v542 = vunpack.c.l.b16 %v474
        %v543 = vpack.c.b16 %v536, %v535
        %v544 = vpack.c.b16 %v538, %v537
        %v545 = vpack.c.b16 %v540, %v539
        %v546 = vpack.c.b16 %v542, %v541
        %v551 = vunpack.c.l.b16 %v475
        %v552 = vunpack.c.h.b16 %v475
        %v553 = vunpack.c.l.b16 %v476
        %v554 = vunpack.c.h.b16 %v476
        %v555 = vunpack.c.l.b16 %v477
        %v556 = vunpack.c.h.b16 %v477
        %v557 = vunpack.c.l.b16 %v478
        %v558 = vunpack.c.h.b16 %v478
        %v559 = vpack.c.b16 %v553, %v551
        %v560 = vpack.c.b16 %v554, %v552
        %v561 = vpack.c.b16 %v557, %v555
        %v562 = vpack.c.b16 %v558, %v556
        %vm567 = vcmask 261120
        %v569 = vsel %vm567, %v543, 0
        %v572 = vsel %vm567, %v544, 0
        %v575 = vsel %vm567, %v545, 0
        %v578 = vsel %vm567, %v546, 0
        %580 = vmatpush.bf16.msra.mxu0 0
        %581 = vmatpush.bf16.msra.mxu0 0
        %582 = vmatpush.bf16.msra.mxu0 0
        %583 = vmatpush.bf16.msra.mxu0 0
        %584 = vmatpush.bf16.msra.mxu0 0
        %585 = vmatpush.bf16.msra.mxu0 0
        %586 = vmatpush.bf16.msra.mxu0 %v561
        %587 = vmatpush.bf16.msra.mxu0 %v559
        %588 = vmatmul.bf16.gmra.mxu0 %v569
        %v589 = vpop.f32.mrf.mxu0
        %v590 = vadd.f32 %v490, %v589
        %v591 = vpop.f32.mrf.mxu0
        %v592 = vadd.f32 %v495, %v591
        %593 = vmatmul.bf16.gmra.mxu0 %v572
        %v594 = vpop.f32.mrf.mxu0
        %v595 = vadd.f32 %v500, %v594
        %v596 = vpop.f32.mrf.mxu0
        %v597 = vadd.f32 %v505, %v596
        %598 = vmatmul.bf16.gmra.mxu0 %v575
        %v599 = vpop.f32.mrf.mxu0
        %v600 = vadd.f32 %v510, %v599
        %v601 = vpop.f32.mrf.mxu0
        %v602 = vadd.f32 %v515, %v601
        %603 = vmatmul.bf16.gmra.mxu0 %v578
        %v604 = vpop.f32.mrf.mxu0
        %v605 = vadd.f32 %v520, %v604
        %v606 = vpop.f32.mrf.mxu0
        %v607 = vadd.f32 %v525, %v606
        %608 = vdwg.mxu0
        %609 = vmatpush.bf16.msra.mxu0 0
        %610 = vmatpush.bf16.msra.mxu0 0
        %611 = vmatpush.bf16.msra.mxu0 0
        %612 = vmatpush.bf16.msra.mxu0 0
        %613 = vmatpush.bf16.msra.mxu0 0
        %614 = vmatpush.bf16.msra.mxu0 0
        %615 = vmatpush.bf16.msra.mxu0 %v562
        %616 = vmatpush.bf16.msra.mxu0 %v560
        %617 = vmatmul.bf16.gmra.mxu0 %v569
        %v618 = vpop.f32.mrf.mxu0
        %v619 = vadd.f32 %v490, %v618
        %v620 = vpop.f32.mrf.mxu0
        %v621 = vadd.f32 %v495, %v620
        %622 = vmatmul.bf16.gmra.mxu0 %v572
        %v623 = vpop.f32.mrf.mxu0
        %v624 = vadd.f32 %v500, %v623
        %v625 = vpop.f32.mrf.mxu0
        %v626 = vadd.f32 %v505, %v625
        %627 = vmatmul.bf16.gmra.mxu0 %v575
        %v628 = vpop.f32.mrf.mxu0
        %v629 = vadd.f32 %v510, %v628
        %v630 = vpop.f32.mrf.mxu0
        %v631 = vadd.f32 %v515, %v630
        %632 = vmatmul.bf16.gmra.mxu0 %v578
        %v633 = vpop.f32.mrf.mxu0
        %v634 = vadd.f32 %v520, %v633
        %v635 = vpop.f32.mrf.mxu0
        %v636 = vadd.f32 %v525, %v635
        %637 = vdwg.mxu0
        %v638 = vld [vmem:[%s11] sm:$0x3]
        %v640 = vperm.slane %v638, 0
        %v641 = vperm.slane %v638, 1
        %v644 = vmul.f32 %v590, %v640
        %v645 = vmul.f32 %v619, %v641
        %v646 = vmul.f32 %v592, %v640
        %v647 = vmul.f32 %v621, %v641
        %v648 = vmul.f32 %v595, %v640
        %v649 = vmul.f32 %v624, %v641
        %v650 = vmul.f32 %v597, %v640
        %v651 = vmul.f32 %v626, %v641
        %v652 = vld [vmem:[%s434] sm:$0xff]
        %v653 = vld [vmem:[%s434 + $0x8] sm:$0xff]
        %v654 = vld [vmem:[%s434 + $0x10] sm:$0xff]
        %v655 = vld [vmem:[%s434 + $0x18] sm:$0xff]
        %v656 = vld [vmem:[%s434 + $0x20] sm:$0xff]
        %v657 = vld [vmem:[%s434 + $0x28] sm:$0xff]
        %v658 = vld [vmem:[%s434 + $0x30] sm:$0xff]
        %v659 = vld [vmem:[%s434 + $0x38] sm:$0xff]
        %v660 = vpack.c.bf16 %v653, %v652
        %v661 = vpack.c.bf16 %v655, %v654
        %v662 = vpack.c.bf16 %v657, %v656
        %v663 = vpack.c.bf16 %v659, %v658
        %v664 = vld [vmem:[%s5] sm:$0xff]
        %v665 = vld [vmem:[%s5 + $0x8] sm:$0xff]
        %v666 = vld [vmem:[%s5 + $0x10] sm:$0xff]
        %v667 = vld [vmem:[%s5 + $0x18] sm:$0xff]
        %v668 = vld [vmem:[%s5 + $0x20] sm:$0xf]
        %v669 = vld [vmem:[%s5 + $0x24] sm:$0xff]
        %v670 = vld [vmem:[%s5 + $0x2c] sm:$0xff]
        %v671 = vld [vmem:[%s5 + $0x34] sm:$0xff]
        %v672 = vld [vmem:[%s5 + $0x3c] sm:$0xff]
        %v673 = vld [vmem:[%s5 + $0x44] sm:$0xf]
        %v674 = vld [vmem:[%s5 + $0x48] sm:$0xff]
        %v675 = vld [vmem:[%s5 + $0x50] sm:$0xff]
        %v676 = vld [vmem:[%s5 + $0x58] sm:$0xff]
        %v677 = vld [vmem:[%s5 + $0x60] sm:$0xff]
        %v678 = vld [vmem:[%s5 + $0x68] sm:$0xf]
        %v679 = vld [vmem:[%s5 + $0x6c] sm:$0xff]
        %v680 = vld [vmem:[%s5 + $0x74] sm:$0xff]
        %v681 = vld [vmem:[%s5 + $0x7c] sm:$0xff]
        %v682 = vld [vmem:[%s5 + $0x84] sm:$0xff]
        %v683 = vld [vmem:[%s5 + $0x8c] sm:$0xf]
        %v684 = vld [vmem:[%s5 + $0x90] sm:$0xff]
        %v685 = vld [vmem:[%s5 + $0x98] sm:$0xff]
        %v686 = vld [vmem:[%s5 + $0xa0] sm:$0xff]
        %v687 = vld [vmem:[%s5 + $0xa8] sm:$0xff]
        %v688 = vld [vmem:[%s5 + $0xb0] sm:$0xf]
        %v689 = vld [vmem:[%s5 + $0xb4] sm:$0xff]
        %v690 = vld [vmem:[%s5 + $0xbc] sm:$0xff]
        %v691 = vld [vmem:[%s5 + $0xc4] sm:$0xff]
        %v692 = vld [vmem:[%s5 + $0xcc] sm:$0xff]
        %v693 = vld [vmem:[%s5 + $0xd4] sm:$0xf]
        %v694 = vld [vmem:[%s5 + $0xd8] sm:$0xff]
        %v695 = vld [vmem:[%s5 + $0xe0] sm:$0xff]
        %v696 = vld [vmem:[%s5 + $0xe8] sm:$0xff]
        %v697 = vld [vmem:[%s5 + $0xf0] sm:$0xff]
        %v698 = vld [vmem:[%s5 + $0xf8] sm:$0xf]
        %v699 = vld [vmem:[%s5 + $0xfc] sm:$0xff]
        %v700 = vld [vmem:[%s5 + $0x104] sm:$0xff]
        %v701 = vld [vmem:[%s5 + $0x10c] sm:$0xff]
        %v702 = vld [vmem:[%s5 + $0x114] sm:$0xff]
        %v703 = vld [vmem:[%s5 + $0x11c] sm:$0xf]
        %v744 = vunpack.c.l.b16 %v664
        %v745 = vunpack.c.h.b16 %v664
        %v746 = vunpack.c.l.b16 %v665
        %v747 = vunpack.c.h.b16 %v665
        %v748 = vunpack.c.l.b16 %v666
        %v749 = vunpack.c.h.b16 %v666
        %v750 = vunpack.c.l.b16 %v667
        %v751 = vunpack.c.h.b16 %v667
        %v752 = vunpack.c.l.b16 %v668
        %v753 = vunpack.c.l.b16 %v669
        %v754 = vunpack.c.h.b16 %v669
        %v755 = vunpack.c.l.b16 %v670
        %v756 = vunpack.c.h.b16 %v670
        %v757 = vunpack.c.l.b16 %v671
        %v758 = vunpack.c.h.b16 %v671
        %v759 = vunpack.c.l.b16 %v672
        %v760 = vunpack.c.h.b16 %v672
        %v761 = vunpack.c.l.b16 %v673
        %v762 = vunpack.c.l.b16 %v674
        %v763 = vunpack.c.h.b16 %v674
        %v764 = vunpack.c.l.b16 %v675
        %v765 = vunpack.c.h.b16 %v675
        %v766 = vunpack.c.l.b16 %v676
        %v767 = vunpack.c.h.b16 %v676
        %v768 = vunpack.c.l.b16 %v677
        %v769 = vunpack.c.h.b16 %v677
        %v770 = vunpack.c.l.b16 %v678
        %v771 = vunpack.c.l.b16 %v679
        %v772 = vunpack.c.h.b16 %v679
        %v773 = vunpack.c.l.b16 %v680
        %v774 = vunpack.c.h.b16 %v680
        %v775 = vunpack.c.l.b16 %v681
        %v776 = vunpack.c.h.b16 %v681
        %v777 = vunpack.c.l.b16 %v682
        %v778 = vunpack.c.h.b16 %v682
        %v779 = vunpack.c.l.b16 %v683
        %v780 = vunpack.c.l.b16 %v684
        %v781 = vunpack.c.h.b16 %v684
        %v782 = vunpack.c.l.b16 %v685
        %v783 = vunpack.c.h.b16 %v685
        %v784 = vunpack.c.l.b16 %v686
        %v785 = vunpack.c.h.b16 %v686
        %v786 = vunpack.c.l.b16 %v687
        %v787 = vunpack.c.h.b16 %v687
        %v788 = vunpack.c.l.b16 %v688
        %v789 = vunpack.c.l.b16 %v689
        %v790 = vunpack.c.h.b16 %v689
        %v791 = vunpack.c.l.b16 %v690
        %v792 = vunpack.c.h.b16 %v690
        %v793 = vunpack.c.l.b16 %v691
        %v794 = vunpack.c.h.b16 %v691
        %v795 = vunpack.c.l.b16 %v692
        %v796 = vunpack.c.h.b16 %v692
        %v797 = vunpack.c.l.b16 %v693
        %v798 = vunpack.c.l.b16 %v694
        %v799 = vunpack.c.h.b16 %v694
        %v800 = vunpack.c.l.b16 %v695
        %v801 = vunpack.c.h.b16 %v695
        %v802 = vunpack.c.l.b16 %v696
        %v803 = vunpack.c.h.b16 %v696
        %v804 = vunpack.c.l.b16 %v697
        %v805 = vunpack.c.h.b16 %v697
        %v806 = vunpack.c.l.b16 %v698
        %v807 = vunpack.c.l.b16 %v699
        %v808 = vunpack.c.h.b16 %v699
        %v809 = vunpack.c.l.b16 %v700
        %v810 = vunpack.c.h.b16 %v700
        %v811 = vunpack.c.l.b16 %v701
        %v812 = vunpack.c.h.b16 %v701
        %v813 = vunpack.c.l.b16 %v702
        %v814 = vunpack.c.h.b16 %v702
        %v815 = vunpack.c.l.b16 %v703
        %v816 = vpack.c.b16 %v753, %v744
        %v817 = vpack.c.b16 %v754, %v745
        %v818 = vpack.c.b16 %v755, %v746
        %v819 = vpack.c.b16 %v756, %v747
        %v820 = vpack.c.b16 %v757, %v748
        %v821 = vpack.c.b16 %v758, %v749
        %v822 = vpack.c.b16 %v759, %v750
        %v823 = vpack.c.b16 %v760, %v751
        %v824 = vpack.c.b16 %v761, %v752
        %v825 = vpack.c.b16 %v771, %v762
        %v826 = vpack.c.b16 %v772, %v763
        %v827 = vpack.c.b16 %v773, %v764
        %v828 = vpack.c.b16 %v774, %v765
        %v829 = vpack.c.b16 %v775, %v766
        %v830 = vpack.c.b16 %v776, %v767
        %v831 = vpack.c.b16 %v777, %v768
        %v832 = vpack.c.b16 %v778, %v769
        %v833 = vpack.c.b16 %v779, %v770
        %v834 = vpack.c.b16 %v789, %v780
        %v835 = vpack.c.b16 %v790, %v781
        %v836 = vpack.c.b16 %v791, %v782
        %v837 = vpack.c.b16 %v792, %v783
        %v838 = vpack.c.b16 %v793, %v784
        %v839 = vpack.c.b16 %v794, %v785
        %v840 = vpack.c.b16 %v795, %v786
        %v841 = vpack.c.b16 %v796, %v787
        %v842 = vpack.c.b16 %v797, %v788
        %v843 = vpack.c.b16 %v807, %v798
        %v844 = vpack.c.b16 %v808, %v799
        %v845 = vpack.c.b16 %v809, %v800
        %v846 = vpack.c.b16 %v810, %v801
        %v847 = vpack.c.b16 %v811, %v802
        %v848 = vpack.c.b16 %v812, %v803
        %v849 = vpack.c.b16 %v813, %v804
        %v850 = vpack.c.b16 %v814, %v805
        %v851 = vpack.c.b16 %v815, %v806
        %vm888 = vcmask 523264
        %v890 = vsel %vm888, %v660, 0
        %v893 = vsel %vm888, %v661, 0
        %v896 = vsel %vm888, %v662, 0
        %v899 = vsel %vm888, %v663, 0
        %901 = vmatpush.bf16.msra.mxu0 0
        %902 = vmatpush.bf16.msra.mxu0 0
        %903 = vmatpush.bf16.msra.mxu0 0
        %904 = vmatpush.bf16.msra.mxu0 0
        %905 = vmatpush.bf16.msra.mxu0 %v843
        %906 = vmatpush.bf16.msra.mxu0 %v834
        %907 = vmatpush.bf16.msra.mxu0 %v825
        %908 = vmatpush.bf16.msra.mxu0 %v816
        %909 = vmatmul.bf16.gmra.mxu0 %v890
        %v910 = vpop.f32.mrf.mxu0
        %v911 = vadd.f32 0.0, %v910
        %v912 = vpop.f32.mrf.mxu0
        %v913 = vadd.f32 0.0, %v912
        %914 = vmatmul.bf16.gmra.mxu0 %v893
        %v915 = vpop.f32.mrf.mxu0
        %v916 = vadd.f32 0.0, %v915
        %v917 = vpop.f32.mrf.mxu0
        %v918 = vadd.f32 0.0, %v917
        %919 = vmatmul.bf16.gmra.mxu0 %v896
        %v920 = vpop.f32.mrf.mxu0
        %v921 = vadd.f32 0.0, %v920
        %v922 = vpop.f32.mrf.mxu0
        %v923 = vadd.f32 0.0, %v922
        %924 = vmatmul.bf16.gmra.mxu0 %v899
        %v925 = vpop.f32.mrf.mxu0
        %v926 = vadd.f32 0.0, %v925
        %v927 = vpop.f32.mrf.mxu0
        %v928 = vadd.f32 0.0, %v927
        %929 = vdwg.mxu0
        %930 = vmatpush.bf16.msra.mxu0 0
        %931 = vmatpush.bf16.msra.mxu0 0
        %932 = vmatpush.bf16.msra.mxu0 0
        %933 = vmatpush.bf16.msra.mxu0 0
        %934 = vmatpush.bf16.msra.mxu0 %v844
        %935 = vmatpush.bf16.msra.mxu0 %v835
        %936 = vmatpush.bf16.msra.mxu0 %v826
        %937 = vmatpush.bf16.msra.mxu0 %v817
        %938 = vmatmul.bf16.gmra.mxu0 %v890
        %v939 = vpop.f32.mrf.mxu0
        %v940 = vadd.f32 0.0, %v939
        %v941 = vpop.f32.mrf.mxu0
        %v942 = vadd.f32 0.0, %v941
        %943 = vmatmul.bf16.gmra.mxu0 %v893
        %v944 = vpop.f32.mrf.mxu0
        %v945 = vadd.f32 0.0, %v944
        %v946 = vpop.f32.mrf.mxu0
        %v947 = vadd.f32 0.0, %v946
        %948 = vmatmul.bf16.gmra.mxu0 %v896
        %v949 = vpop.f32.mrf.mxu0
        %v950 = vadd.f32 0.0, %v949
        %v951 = vpop.f32.mrf.mxu0
        %v952 = vadd.f32 0.0, %v951
        %953 = vmatmul.bf16.gmra.mxu0 %v899
        %v954 = vpop.f32.mrf.mxu0
        %v955 = vadd.f32 0.0, %v954
        %v956 = vpop.f32.mrf.mxu0
        %v957 = vadd.f32 0.0, %v956
        %958 = vdwg.mxu0
        %959 = vmatpush.bf16.msra.mxu0 0
        %960 = vmatpush.bf16.msra.mxu0 0
        %961 = vmatpush.bf16.msra.mxu0 0
        %962 = vmatpush.bf16.msra.mxu0 0
        %963 = vmatpush.bf16.msra.mxu0 %v845
        %964 = vmatpush.bf16.msra.mxu0 %v836
        %965 = vmatpush.bf16.msra.mxu0 %v827
        %966 = vmatpush.bf16.msra.mxu0 %v818
        %967 = vmatmul.bf16.gmra.mxu0 %v890
        %v968 = vpop.f32.mrf.mxu0
        %v969 = vadd.f32 0.0, %v968
        %v970 = vpop.f32.mrf.mxu0
        %v971 = vadd.f32 0.0, %v970
        %972 = vmatmul.bf16.gmra.mxu0 %v893
        %v973 = vpop.f32.mrf.mxu0
        %v974 = vadd.f32 0.0, %v973
        %v975 = vpop.f32.mrf.mxu0
        %v976 = vadd.f32 0.0, %v975
        %977 = vmatmul.bf16.gmra.mxu0 %v896
        %v978 = vpop.f32.mrf.mxu0
        %v979 = vadd.f32 0.0, %v978
        %v980 = vpop.f32.mrf.mxu0
        %v981 = vadd.f32 0.0, %v980
        %982 = vmatmul.bf16.gmra.mxu0 %v899
        %v983 = vpop.f32.mrf.mxu0
        %v984 = vadd.f32 0.0, %v983
        %v985 = vpop.f32.mrf.mxu0
        %v986 = vadd.f32 0.0, %v985
        %987 = vdwg.mxu0
        %988 = vmatpush.bf16.msra.mxu0 0
        %989 = vmatpush.bf16.msra.mxu0 0
        %990 = vmatpush.bf16.msra.mxu0 0
        %991 = vmatpush.bf16.msra.mxu0 0
        %992 = vmatpush.bf16.msra.mxu0 %v846
        %993 = vmatpush.bf16.msra.mxu0 %v837
        %994 = vmatpush.bf16.msra.mxu0 %v828
        %995 = vmatpush.bf16.msra.mxu0 %v819
        %996 = vmatmul.bf16.gmra.mxu0 %v890
        %v997 = vpop.f32.mrf.mxu0
        %v998 = vadd.f32 0.0, %v997
        %v999 = vpop.f32.mrf.mxu0
        %v1000 = vadd.f32 0.0, %v999
        %1001 = vmatmul.bf16.gmra.mxu0 %v893
        %v1002 = vpop.f32.mrf.mxu0
        %v1003 = vadd.f32 0.0, %v1002
        %v1004 = vpop.f32.mrf.mxu0
        %v1005 = vadd.f32 0.0, %v1004
        %1006 = vmatmul.bf16.gmra.mxu0 %v896
        %v1007 = vpop.f32.mrf.mxu0
        %v1008 = vadd.f32 0.0, %v1007
        %v1009 = vpop.f32.mrf.mxu0
        %v1010 = vadd.f32 0.0, %v1009
        %1011 = vmatmul.bf16.gmra.mxu0 %v899
        %v1012 = vpop.f32.mrf.mxu0
        %v1013 = vadd.f32 0.0, %v1012
        %v1014 = vpop.f32.mrf.mxu0
        %v1015 = vadd.f32 0.0, %v1014
        %1016 = vdwg.mxu0
        %1017 = vmatpush.bf16.msra.mxu0 0
        %1018 = vmatpush.bf16.msra.mxu0 0
        %1019 = vmatpush.bf16.msra.mxu0 0
        %1020 = vmatpush.bf16.msra.mxu0 0
        %1021 = vmatpush.bf16.msra.mxu0 %v847
        %1022 = vmatpush.bf16.msra.mxu0 %v838
        %1023 = vmatpush.bf16.msra.mxu0 %v829
        %1024 = vmatpush.bf16.msra.mxu0 %v820
        %1025 = vmatmul.bf16.gmra.mxu0 %v890
        %v1026 = vpop.f32.mrf.mxu0
        %v1027 = vadd.f32 0.0, %v1026
        %v1028 = vpop.f32.mrf.mxu0
        %v1029 = vadd.f32 0.0, %v1028
        %1030 = vmatmul.bf16.gmra.mxu0 %v893
        %v1031 = vpop.f32.mrf.mxu0
        %v1032 = vadd.f32 0.0, %v1031
        %v1033 = vpop.f32.mrf.mxu0
        %v1034 = vadd.f32 0.0, %v1033
        %1035 = vmatmul.bf16.gmra.mxu0 %v896
        %v1036 = vpop.f32.mrf.mxu0
        %v1037 = vadd.f32 0.0, %v1036
        %v1038 = vpop.f32.mrf.mxu0
        %v1039 = vadd.f32 0.0, %v1038
        %1040 = vmatmul.bf16.gmra.mxu0 %v899
        %v1041 = vpop.f32.mrf.mxu0
        %v1042 = vadd.f32 0.0, %v1041
        %v1043 = vpop.f32.mrf.mxu0
        %v1044 = vadd.f32 0.0, %v1043
        %1045 = vdwg.mxu0
        %1046 = vmatpush.bf16.msra.mxu0 0
        %1047 = vmatpush.bf16.msra.mxu0 0
        %1048 = vmatpush.bf16.msra.mxu0 0
        %1049 = vmatpush.bf16.msra.mxu0 0
        %1050 = vmatpush.bf16.msra.mxu0 %v848
        %1051 = vmatpush.bf16.msra.mxu0 %v839
        %1052 = vmatpush.bf16.msra.mxu0 %v830
        %1053 = vmatpush.bf16.msra.mxu0 %v821
        %1054 = vmatmul.bf16.gmra.mxu0 %v890
        %v1055 = vpop.f32.mrf.mxu0
        %v1056 = vadd.f32 0.0, %v1055
        %v1057 = vpop.f32.mrf.mxu0
        %v1058 = vadd.f32 0.0, %v1057
        %1059 = vmatmul.bf16.gmra.mxu0 %v893
        %v1060 = vpop.f32.mrf.mxu0
        %v1061 = vadd.f32 0.0, %v1060
        %v1062 = vpop.f32.mrf.mxu0
        %v1063 = vadd.f32 0.0, %v1062
        %1064 = vmatmul.bf16.gmra.mxu0 %v896
        %v1065 = vpop.f32.mrf.mxu0
        %v1066 = vadd.f32 0.0, %v1065
        %v1067 = vpop.f32.mrf.mxu0
        %v1068 = vadd.f32 0.0, %v1067
        %1069 = vmatmul.bf16.gmra.mxu0 %v899
        %v1070 = vpop.f32.mrf.mxu0
        %v1071 = vadd.f32 0.0, %v1070
        %v1072 = vpop.f32.mrf.mxu0
        %v1073 = vadd.f32 0.0, %v1072
        %1074 = vdwg.mxu0
        %1075 = vmatpush.bf16.msra.mxu0 0
        %1076 = vmatpush.bf16.msra.mxu0 0
        %1077 = vmatpush.bf16.msra.mxu0 0
        %1078 = vmatpush.bf16.msra.mxu0 0
        %1079 = vmatpush.bf16.msra.mxu0 %v849
        %1080 = vmatpush.bf16.msra.mxu0 %v840
        %1081 = vmatpush.bf16.msra.mxu0 %v831
        %1082 = vmatpush.bf16.msra.mxu0 %v822
        %1083 = vmatmul.bf16.gmra.mxu0 %v890
        %v1084 = vpop.f32.mrf.mxu0
        %v1085 = vadd.f32 0.0, %v1084
        %v1086 = vpop.f32.mrf.mxu0
        %v1087 = vadd.f32 0.0, %v1086
        %1088 = vmatmul.bf16.gmra.mxu0 %v893
        %v1089 = vpop.f32.mrf.mxu0
        %v1090 = vadd.f32 0.0, %v1089
        %v1091 = vpop.f32.mrf.mxu0
        %v1092 = vadd.f32 0.0, %v1091
        %1093 = vmatmul.bf16.gmra.mxu0 %v896
        %v1094 = vpop.f32.mrf.mxu0
        %v1095 = vadd.f32 0.0, %v1094
        %v1096 = vpop.f32.mrf.mxu0
        %v1097 = vadd.f32 0.0, %v1096
        %1098 = vmatmul.bf16.gmra.mxu0 %v899
        %v1099 = vpop.f32.mrf.mxu0
        %v1100 = vadd.f32 0.0, %v1099
        %v1101 = vpop.f32.mrf.mxu0
        %v1102 = vadd.f32 0.0, %v1101
        %1103 = vdwg.mxu0
        %1104 = vmatpush.bf16.msra.mxu0 0
        %1105 = vmatpush.bf16.msra.mxu0 0
        %1106 = vmatpush.bf16.msra.mxu0 0
        %1107 = vmatpush.bf16.msra.mxu0 0
        %1108 = vmatpush.bf16.msra.mxu0 %v850
        %1109 = vmatpush.bf16.msra.mxu0 %v841
        %1110 = vmatpush.bf16.msra.mxu0 %v832
        %1111 = vmatpush.bf16.msra.mxu0 %v823
        %1112 = vmatmul.bf16.gmra.mxu0 %v890
        %v1113 = vpop.f32.mrf.mxu0
        %v1114 = vadd.f32 0.0, %v1113
        %v1115 = vpop.f32.mrf.mxu0
        %v1116 = vadd.f32 0.0, %v1115
        %1117 = vmatmul.bf16.gmra.mxu0 %v893
        %v1118 = vpop.f32.mrf.mxu0
        %v1119 = vadd.f32 0.0, %v1118
        %v1120 = vpop.f32.mrf.mxu0
        %v1121 = vadd.f32 0.0, %v1120
        %1122 = vmatmul.bf16.gmra.mxu0 %v896
        %v1123 = vpop.f32.mrf.mxu0
        %v1124 = vadd.f32 0.0, %v1123
        %v1125 = vpop.f32.mrf.mxu0
        %v1126 = vadd.f32 0.0, %v1125
        %1127 = vmatmul.bf16.gmra.mxu0 %v899
        %v1128 = vpop.f32.mrf.mxu0
        %v1129 = vadd.f32 0.0, %v1128
        %v1130 = vpop.f32.mrf.mxu0
        %v1131 = vadd.f32 0.0, %v1130
        %1132 = vdwg.mxu0
        %1133 = vmatpush.bf16.msra.mxu0 0
        %1134 = vmatpush.bf16.msra.mxu0 0
        %1135 = vmatpush.bf16.msra.mxu0 0
        %1136 = vmatpush.bf16.msra.mxu0 0
        %1137 = vmatpush.bf16.msra.mxu0 %v851
        %1138 = vmatpush.bf16.msra.mxu0 %v842
        %1139 = vmatpush.bf16.msra.mxu0 %v833
        %1140 = vmatpush.bf16.msra.mxu0 %v824
        %1141 = vmatmul.bf16.gmra.mxu0 %v890
        %v1142 = vpop.f32.mrf.mxu0
        %v1143 = vadd.f32 0.0, %v1142
        %v1144 = vpop.f32.mrf.mxu0
        %v1145 = vadd.f32 0.0, %v1144
        %1146 = vmatmul.bf16.gmra.mxu0 %v893
        %v1147 = vpop.f32.mrf.mxu0
        %v1148 = vadd.f32 0.0, %v1147
        %v1149 = vpop.f32.mrf.mxu0
        %v1150 = vadd.f32 0.0, %v1149
        %1151 = vmatmul.bf16.gmra.mxu0 %v896
        %v1152 = vpop.f32.mrf.mxu0
        %v1153 = vadd.f32 0.0, %v1152
        %v1154 = vpop.f32.mrf.mxu0
        %v1155 = vadd.f32 0.0, %v1154
        %1156 = vmatmul.bf16.gmra.mxu0 %v899
        %v1157 = vpop.f32.mrf.mxu0
        %v1158 = vadd.f32 0.0, %v1157
        %v1159 = vpop.f32.mrf.mxu0
        %v1160 = vadd.f32 0.0, %v1159
        %1161 = vdwg.mxu0
        %v1162 = vpack.c.bf16 %v911, %v911
        %v1163 = vpack.c.bf16 %v913, %v913
        %v1164 = vpack.c.bf16 %v916, %v916
        %v1165 = vpack.c.bf16 %v918, %v918
        %1166 = vst [vmem:[#allocation3] sm:$0xf] %v1162
        %1167 = vst [vmem:[#allocation3 + $0x8] sm:$0xf] %v1163
        %1168 = vst [vmem:[#allocation3 + $0x10] sm:$0xf] %v1164
        %1169 = vst [vmem:[#allocation3 + $0x18] sm:$0xf] %v1165
        %v1170 = vpack.c.bf16 %v940, %v940
        %v1171 = vpack.c.bf16 %v942, %v942
        %v1172 = vpack.c.bf16 %v945, %v945
        %v1173 = vpack.c.bf16 %v947, %v947
        %1174 = vst [vmem:[#allocation3 + $0x20] sm:$0xf] %v1170
        %1175 = vst [vmem:[#allocation3 + $0x28] sm:$0xf] %v1171
        %1176 = vst [vmem:[#allocation3 + $0x30] sm:$0xf] %v1172
        %1177 = vst [vmem:[#allocation3 + $0x38] sm:$0xf] %v1173
        %v1178 = vpack.c.bf16 %v969, %v969
        %v1179 = vpack.c.bf16 %v971, %v971
        %v1180 = vpack.c.bf16 %v974, %v974
        %v1181 = vpack.c.bf16 %v976, %v976
        %1182 = vst [vmem:[#allocation3 + $0x40] sm:$0xf] %v1178
        %1183 = vst [vmem:[#allocation3 + $0x48] sm:$0xf] %v1179
        %1184 = vst [vmem:[#allocation3 + $0x50] sm:$0xf] %v1180
        %1185 = vst [vmem:[#allocation3 + $0x58] sm:$0xf] %v1181
        %v1186 = vpack.c.bf16 %v998, %v998
        %v1187 = vpack.c.bf16 %v1000, %v1000
        %v1188 = vpack.c.bf16 %v1003, %v1003
        %v1189 = vpack.c.bf16 %v1005, %v1005
        %1190 = vst [vmem:[#allocation3 + $0x60] sm:$0xf] %v1186
        %1191 = vst [vmem:[#allocation3 + $0x68] sm:$0xf] %v1187
        %1192 = vst [vmem:[#allocation3 + $0x70] sm:$0xf] %v1188
        %1193 = vst [vmem:[#allocation3 + $0x78] sm:$0xf] %v1189
        %v1194 = vpack.c.bf16 %v1027, %v1027
        %v1195 = vpack.c.bf16 %v1029, %v1029
        %v1196 = vpack.c.bf16 %v1032, %v1032
        %v1197 = vpack.c.bf16 %v1034, %v1034
        %1198 = vst [vmem:[#allocation3 + $0x80] sm:$0xf] %v1194
        %1199 = vst [vmem:[#allocation3 + $0x88] sm:$0xf] %v1195
        %1200 = vst [vmem:[#allocation3 + $0x90] sm:$0xf] %v1196
        %1201 = vst [vmem:[#allocation3 + $0x98] sm:$0xf] %v1197
        %v1202 = vpack.c.bf16 %v1056, %v1056
        %v1203 = vpack.c.bf16 %v1058, %v1058
        %v1204 = vpack.c.bf16 %v1061, %v1061
        %v1205 = vpack.c.bf16 %v1063, %v1063
        %1206 = vst [vmem:[#allocation3 + $0xa0] sm:$0xf] %v1202
        %1207 = vst [vmem:[#allocation3 + $0xa8] sm:$0xf] %v1203
        %1208 = vst [vmem:[#allocation3 + $0xb0] sm:$0xf] %v1204
        %1209 = vst [vmem:[#allocation3 + $0xb8] sm:$0xf] %v1205
        %v1210 = vpack.c.bf16 %v1085, %v1085
        %v1211 = vpack.c.bf16 %v1087, %v1087
        %v1212 = vpack.c.bf16 %v1090, %v1090
        %v1213 = vpack.c.bf16 %v1092, %v1092
        %1214 = vst [vmem:[#allocation3 + $0xc0] sm:$0xf] %v1210
        %1215 = vst [vmem:[#allocation3 + $0xc8] sm:$0xf] %v1211
        %1216 = vst [vmem:[#allocation3 + $0xd0] sm:$0xf] %v1212
        %1217 = vst [vmem:[#allocation3 + $0xd8] sm:$0xf] %v1213
        %v1218 = vpack.c.bf16 %v1114, %v1114
        %v1219 = vpack.c.bf16 %v1116, %v1116
        %v1220 = vpack.c.bf16 %v1119, %v1119
        %v1221 = vpack.c.bf16 %v1121, %v1121
        %1222 = vst [vmem:[#allocation3 + $0xe0] sm:$0xf] %v1218
        %1223 = vst [vmem:[#allocation3 + $0xe8] sm:$0xf] %v1219
        %1224 = vst [vmem:[#allocation3 + $0xf0] sm:$0xf] %v1220
        %1225 = vst [vmem:[#allocation3 + $0xf8] sm:$0xf] %v1221
        %v1226 = vpack.c.bf16 %v1143, %v1143
        %v1227 = vpack.c.bf16 %v1145, %v1145
        %v1228 = vpack.c.bf16 %v1148, %v1148
        %v1229 = vpack.c.bf16 %v1150, %v1150
        %1230 = vst [vmem:[#allocation3 + $0x100] sm:$0xf] %v1226
        %1231 = vst [vmem:[#allocation3 + $0x108] sm:$0xf] %v1227
        %1232 = vst [vmem:[#allocation3 + $0x110] sm:$0xf] %v1228
        %1233 = vst [vmem:[#allocation3 + $0x118] sm:$0xf] %v1229
        %v1234 = vpack.c.bf16 %v921, %v921
        %v1235 = vpack.c.bf16 %v923, %v923
        %v1236 = vpack.c.bf16 %v926, %v926
        %v1237 = vpack.c.bf16 %v928, %v928
        %1238 = vst [vmem:[#allocation3 + $0x4] sm:$0xf] %v1234
        %1239 = vst [vmem:[#allocation3 + $0xc] sm:$0xf] %v1235
        %1240 = vst [vmem:[#allocation3 + $0x14] sm:$0xf] %v1236
        %1241 = vst [vmem:[#allocation3 + $0x1c] sm:$0xf] %v1237
        %v1242 = vpack.c.bf16 %v950, %v950
        %v1243 = vpack.c.bf16 %v952, %v952
        %v1244 = vpack.c.bf16 %v955, %v955
        %v1245 = vpack.c.bf16 %v957, %v957
        %1246 = vst [vmem:[#allocation3 + $0x24] sm:$0xf] %v1242
        %1247 = vst [vmem:[#allocation3 + $0x2c] sm:$0xf] %v1243
        %1248 = vst [vmem:[#allocation3 + $0x34] sm:$0xf] %v1244
        %1249 = vst [vmem:[#allocation3 + $0x3c] sm:$0xf] %v1245
        %v1250 = vpack.c.bf16 %v979, %v979
        %v1251 = vpack.c.bf16 %v981, %v981
        %v1252 = vpack.c.bf16 %v984, %v984
        %v1253 = vpack.c.bf16 %v986, %v986
        %1254 = vst [vmem:[#allocation3 + $0x44] sm:$0xf] %v1250
        %1255 = vst [vmem:[#allocation3 + $0x4c] sm:$0xf] %v1251
        %1256 = vst [vmem:[#allocation3 + $0x54] sm:$0xf] %v1252
        %1257 = vst [vmem:[#allocation3 + $0x5c] sm:$0xf] %v1253
        %v1258 = vpack.c.bf16 %v1008, %v1008
        %v1259 = vpack.c.bf16 %v1010, %v1010
        %v1260 = vpack.c.bf16 %v1013, %v1013
        %v1261 = vpack.c.bf16 %v1015, %v1015
        %1262 = vst [vmem:[#allocation3 + $0x64] sm:$0xf] %v1258
        %1263 = vst [vmem:[#allocation3 + $0x6c] sm:$0xf] %v1259
        %1264 = vst [vmem:[#allocation3 + $0x74] sm:$0xf] %v1260
        %1265 = vst [vmem:[#allocation3 + $0x7c] sm:$0xf] %v1261
        %v1266 = vpack.c.bf16 %v1037, %v1037
        %v1267 = vpack.c.bf16 %v1039, %v1039
        %v1268 = vpack.c.bf16 %v1042, %v1042
        %v1269 = vpack.c.bf16 %v1044, %v1044
        %1270 = vst [vmem:[#allocation3 + $0x84] sm:$0xf] %v1266
        %1271 = vst [vmem:[#allocation3 + $0x8c] sm:$0xf] %v1267
        %1272 = vst [vmem:[#allocation3 + $0x94] sm:$0xf] %v1268
        %1273 = vst [vmem:[#allocation3 + $0x9c] sm:$0xf] %v1269
        %v1274 = vpack.c.bf16 %v1066, %v1066
        %v1275 = vpack.c.bf16 %v1068, %v1068
        %v1276 = vpack.c.bf16 %v1071, %v1071
        %v1277 = vpack.c.bf16 %v1073, %v1073
        %1278 = vst [vmem:[#allocation3 + $0xa4] sm:$0xf] %v1274
        %1279 = vst [vmem:[#allocation3 + $0xac] sm:$0xf] %v1275
        %1280 = vst [vmem:[#allocation3 + $0xb4] sm:$0xf] %v1276
        %1281 = vst [vmem:[#allocation3 + $0xbc] sm:$0xf] %v1277
        %v1282 = vpack.c.bf16 %v1095, %v1095
        %v1283 = vpack.c.bf16 %v1097, %v1097
        %v1284 = vpack.c.bf16 %v1100, %v1100
        %v1285 = vpack.c.bf16 %v1102, %v1102
        %1286 = vst [vmem:[#allocation3 + $0xc4] sm:$0xf] %v1282
        %1287 = vst [vmem:[#allocation3 + $0xcc] sm:$0xf] %v1283
        %1288 = vst [vmem:[#allocation3 + $0xd4] sm:$0xf] %v1284
        %1289 = vst [vmem:[#allocation3 + $0xdc] sm:$0xf] %v1285
        %v1290 = vpack.c.bf16 %v1124, %v1124
        %v1291 = vpack.c.bf16 %v1126, %v1126
        %v1292 = vpack.c.bf16 %v1129, %v1129
        %v1293 = vpack.c.bf16 %v1131, %v1131
        %1294 = vst [vmem:[#allocation3 + $0xe4] sm:$0xf] %v1290
        %1295 = vst [vmem:[#allocation3 + $0xec] sm:$0xf] %v1291
        %1296 = vst [vmem:[#allocation3 + $0xf4] sm:$0xf] %v1292
        %1297 = vst [vmem:[#allocation3 + $0xfc] sm:$0xf] %v1293
        %v1298 = vpack.c.bf16 %v1153, %v1153
        %v1299 = vpack.c.bf16 %v1155, %v1155
        %v1300 = vpack.c.bf16 %v1158, %v1158
        %v1301 = vpack.c.bf16 %v1160, %v1160
        %1302 = vst [vmem:[#allocation3 + $0x104] sm:$0xf] %v1298
        %1303 = vst [vmem:[#allocation3 + $0x10c] sm:$0xf] %v1299
        %1304 = vst [vmem:[#allocation3 + $0x114] sm:$0xf] %v1300
        %1305 = vst [vmem:[#allocation3 + $0x11c] sm:$0xf] %v1301
        %v1306 = vld [vmem:[%s4] sm:$0xff]
        %v1307 = vld [vmem:[%s4 + $0x8] sm:$0xf]
        %v1308 = vld [vmem:[%s4 + $0xc] sm:$0xff]
        %v1309 = vld [vmem:[%s4 + $0x14] sm:$0xf]
        %v1310 = vld [vmem:[%s4 + $0x18] sm:$0xff]
        %v1311 = vld [vmem:[%s4 + $0x20] sm:$0xf]
        %v1312 = vld [vmem:[%s4 + $0x24] sm:$0xff]
        %v1313 = vld [vmem:[%s4 + $0x2c] sm:$0xf]
        %v1314 = vld [vmem:[#allocation3] sm:$0xff]
        %v1315 = vld [vmem:[#allocation3 + $0x8] sm:$0xff]
        %v1316 = vld [vmem:[#allocation3 + $0x10] sm:$0xff]
        %v1317 = vld [vmem:[#allocation3 + $0x18] sm:$0xff]
        %v1318 = vld [vmem:[#allocation3 + $0x20] sm:$0xff]
        %v1319 = vld [vmem:[#allocation3 + $0x28] sm:$0xff]
        %v1320 = vld [vmem:[#allocation3 + $0x30] sm:$0xff]
        %v1321 = vld [vmem:[#allocation3 + $0x38] sm:$0xff]
        %v1322 = vld [vmem:[#allocation3 + $0x40] sm:$0xff]
        %v1323 = vld [vmem:[#allocation3 + $0x48] sm:$0xff]
        %v1324 = vld [vmem:[#allocation3 + $0x50] sm:$0xff]
        %v1325 = vld [vmem:[#allocation3 + $0x58] sm:$0xff]
        %v1326 = vld [vmem:[#allocation3 + $0x60] sm:$0xff]
        %v1327 = vld [vmem:[#allocation3 + $0x68] sm:$0xff]
        %v1328 = vld [vmem:[#allocation3 + $0x70] sm:$0xff]
        %v1329 = vld [vmem:[#allocation3 + $0x78] sm:$0xff]
        %v1330 = vld [vmem:[#allocation3 + $0x80] sm:$0xff]
        %v1331 = vld [vmem:[#allocation3 + $0x88] sm:$0xff]
        %v1332 = vld [vmem:[#allocation3 + $0x90] sm:$0xff]
        %v1333 = vld [vmem:[#allocation3 + $0x98] sm:$0xff]
        %v1334 = vld [vmem:[#allocation3 + $0xa0] sm:$0xff]
        %v1335 = vld [vmem:[#allocation3 + $0xa8] sm:$0xff]
        %v1336 = vld [vmem:[#allocation3 + $0xb0] sm:$0xff]
        %v1337 = vld [vmem:[#allocation3 + $0xb8] sm:$0xff]
        %v1338 = vld [vmem:[#allocation3 + $0xc0] sm:$0xff]
        %v1339 = vld [vmem:[#allocation3 + $0xc8] sm:$0xff]
        %v1340 = vld [vmem:[#allocation3 + $0xd0] sm:$0xff]
        %v1341 = vld [vmem:[#allocation3 + $0xd8] sm:$0xff]
        %v1342 = vld [vmem:[#allocation3 + $0xe0] sm:$0xff]
        %v1343 = vld [vmem:[#allocation3 + $0xe8] sm:$0xff]
        %v1344 = vld [vmem:[#allocation3 + $0xf0] sm:$0xff]
        %v1345 = vld [vmem:[#allocation3 + $0xf8] sm:$0xff]
        %v1346 = vld [vmem:[#allocation3 + $0x100] sm:$0xff]
        %v1347 = vld [vmem:[#allocation3 + $0x108] sm:$0xff]
        %v1348 = vld [vmem:[#allocation3 + $0x110] sm:$0xff]
        %v1349 = vld [vmem:[#allocation3 + $0x118] sm:$0xff]
        %v1350 = vld [vmem:[%s6] sm:$0xff]
        %v1351 = vld [vmem:[%s6 + $0x8] sm:$0xff]
        %v1352 = vld [vmem:[%s6 + $0x10] sm:$0xff]
        %v1353 = vld [vmem:[%s6 + $0x18] sm:$0xff]
        %v1354 = vld [vmem:[%s6 + $0x20] sm:$0xff]
        %v1355 = vld [vmem:[%s6 + $0x28] sm:$0xff]
        %v1356 = vld [vmem:[%s6 + $0x30] sm:$0xff]
        %v1357 = vld [vmem:[%s6 + $0x38] sm:$0xff]
        %v1366 = vunpack.c.l.b16 %v1306
        %v1367 = vunpack.c.h.b16 %v1306
        %v1368 = vunpack.c.l.b16 %v1307
        %v1369 = vunpack.c.l.b16 %v1308
        %v1370 = vunpack.c.h.b16 %v1308
        %v1371 = vunpack.c.l.b16 %v1309
        %v1372 = vunpack.c.l.b16 %v1310
        %v1373 = vunpack.c.h.b16 %v1310
        %v1374 = vunpack.c.l.b16 %v1311
        %v1375 = vunpack.c.l.b16 %v1312
        %v1376 = vunpack.c.h.b16 %v1312
        %v1377 = vunpack.c.l.b16 %v1313
        %v1378 = vpack.c.b16 %v1369, %v1366
        %v1379 = vpack.c.b16 %v1370, %v1367
        %v1380 = vpack.c.b16 %v1371, %v1368
        %v1381 = vpack.c.b16 %v1375, %v1372
        %v1382 = vpack.c.b16 %v1376, %v1373
        %v1383 = vpack.c.b16 %v1377, %v1374
        %v1424 = vunpack.c.l.b16 %v1314
        %v1425 = vunpack.c.h.b16 %v1314
        %v1426 = vunpack.c.l.b16 %v1315
        %v1427 = vunpack.c.h.b16 %v1315
        %v1428 = vunpack.c.l.b16 %v1316
        %v1429 = vunpack.c.h.b16 %v1316
        %v1430 = vunpack.c.l.b16 %v1317
        %v1431 = vunpack.c.h.b16 %v1317
        %v1432 = vunpack.c.l.b16 %v1318
        %v1433 = vunpack.c.h.b16 %v1318
        %v1434 = vunpack.c.l.b16 %v1319
        %v1435 = vunpack.c.h.b16 %v1319
        %v1436 = vunpack.c.l.b16 %v1320
        %v1437 = vunpack.c.h.b16 %v1320
        %v1438 = vunpack.c.l.b16 %v1321
        %v1439 = vunpack.c.h.b16 %v1321
        %v1440 = vunpack.c.l.b16 %v1322
        %v1441 = vunpack.c.h.b16 %v1322
        %v1442 = vunpack.c.l.b16 %v1323
        %v1443 = vunpack.c.h.b16 %v1323
        %v1444 = vunpack.c.l.b16 %v1324
        %v1445 = vunpack.c.h.b16 %v1324
        %v1446 = vunpack.c.l.b16 %v1325
        %v1447 = vunpack.c.h.b16 %v1325
        %v1448 = vunpack.c.l.b16 %v1326
        %v1449 = vunpack.c.h.b16 %v1326
        %v1450 = vunpack.c.l.b16 %v1327
        %v1451 = vunpack.c.h.b16 %v1327
        %v1452 = vunpack.c.l.b16 %v1328
        %v1453 = vunpack.c.h.b16 %v1328
        %v1454 = vunpack.c.l.b16 %v1329
        %v1455 = vunpack.c.h.b16 %v1329
        %v1456 = vunpack.c.l.b16 %v1330
        %v1457 = vunpack.c.h.b16 %v1330
        %v1458 = vunpack.c.l.b16 %v1331
        %v1459 = vunpack.c.h.b16 %v1331
        %v1460 = vunpack.c.l.b16 %v1332
        %v1461 = vunpack.c.h.b16 %v1332
        %v1462 = vunpack.c.l.b16 %v1333
        %v1463 = vunpack.c.h.b16 %v1333
        %v1464 = vunpack.c.l.b16 %v1334
        %v1465 = vunpack.c.h.b16 %v1334
        %v1466 = vunpack.c.l.b16 %v1335
        %v1467 = vunpack.c.h.b16 %v1335
        %v1468 = vunpack.c.l.b16 %v1336
        %v1469 = vunpack.c.h.b16 %v1336
        %v1470 = vunpack.c.l.b16 %v1337
        %v1471 = vunpack.c.h.b16 %v1337
        %v1472 = vunpack.c.l.b16 %v1338
        %v1473 = vunpack.c.h.b16 %v1338
        %v1474 = vunpack.c.l.b16 %v1339
        %v1475 = vunpack.c.h.b16 %v1339
        %v1476 = vunpack.c.l.b16 %v1340
        %v1477 = vunpack.c.h.b16 %v1340
        %v1478 = vunpack.c.l.b16 %v1341
        %v1479 = vunpack.c.h.b16 %v1341
        %v1480 = vunpack.c.l.b16 %v1342
        %v1481 = vunpack.c.h.b16 %v1342
        %v1482 = vunpack.c.l.b16 %v1343
        %v1483 = vunpack.c.h.b16 %v1343
        %v1484 = vunpack.c.l.b16 %v1344
        %v1485 = vunpack.c.h.b16 %v1344
        %v1486 = vunpack.c.l.b16 %v1345
        %v1487 = vunpack.c.h.b16 %v1345
        %v1488 = vunpack.c.l.b16 %v1346
        %v1489 = vunpack.c.h.b16 %v1346
        %v1490 = vunpack.c.l.b16 %v1347
        %v1491 = vunpack.c.h.b16 %v1347
        %v1492 = vunpack.c.l.b16 %v1348
        %v1493 = vunpack.c.h.b16 %v1348
        %v1494 = vunpack.c.l.b16 %v1349
        %v1495 = vunpack.c.h.b16 %v1349
        %v1496 = vpack.c.b16 %v1426, %v1424
        %v1497 = vpack.c.b16 %v1427, %v1425
        %v1498 = vpack.c.b16 %v1430, %v1428
        %v1499 = vpack.c.b16 %v1431, %v1429
        %v1500 = vpack.c.b16 %v1434, %v1432
        %v1501 = vpack.c.b16 %v1435, %v1433
        %v1502 = vpack.c.b16 %v1438, %v1436
        %v1503 = vpack.c.b16 %v1439, %v1437
        %v1504 = vpack.c.b16 %v1442, %v1440
        %v1505 = vpack.c.b16 %v1443, %v1441
        %v1506 = vpack.c.b16 %v1446, %v1444
        %v1507 = vpack.c.b16 %v1447, %v1445
        %v1508 = vpack.c.b16 %v1450, %v1448
        %v1509 = vpack.c.b16 %v1451, %v1449
        %v1510 = vpack.c.b16 %v1454, %v1452
        %v1511 = vpack.c.b16 %v1455, %v1453
        %v1512 = vpack.c.b16 %v1458, %v1456
        %v1513 = vpack.c.b16 %v1459, %v1457
        %v1514 = vpack.c.b16 %v1462, %v1460
        %v1515 = vpack.c.b16 %v1463, %v1461
        %v1516 = vpack.c.b16 %v1466, %v1464
        %v1517 = vpack.c.b16 %v1467, %v1465
        %v1518 = vpack.c.b16 %v1470, %v1468
        %v1519 = vpack.c.b16 %v1471, %v1469
        %v1520 = vpack.c.b16 %v1474, %v1472
        %v1521 = vpack.c.b16 %v1475, %v1473
        %v1522 = vpack.c.b16 %v1478, %v1476
        %v1523 = vpack.c.b16 %v1479, %v1477
        %v1524 = vpack.c.b16 %v1482, %v1480
        %v1525 = vpack.c.b16 %v1483, %v1481
        %v1526 = vpack.c.b16 %v1486, %v1484
        %v1527 = vpack.c.b16 %v1487, %v1485
        %v1528 = vpack.c.b16 %v1490, %v1488
        %v1529 = vpack.c.b16 %v1491, %v1489
        %v1530 = vpack.c.b16 %v1494, %v1492
        %v1531 = vpack.c.b16 %v1495, %v1493
        %v1569 = vsel %vm567, %v1380, 0
        %v1572 = vsel %vm567, %v1383, 0
        %1574 = vmatpush.bf16.msra.mxu0 %v1510
        %1575 = vmatpush.bf16.msra.mxu0 %v1508
        %1576 = vmatpush.bf16.msra.mxu0 %v1506
        %1577 = vmatpush.bf16.msra.mxu0 %v1504
        %1578 = vmatpush.bf16.msra.mxu0 %v1502
        %1579 = vmatpush.bf16.msra.mxu0 %v1500
        %1580 = vmatpush.bf16.msra.mxu0 %v1498
        %1581 = vmatpush.bf16.msra.mxu0 %v1496
        %1582 = vmatmul.bf16.gmra.mxu0 %v1378
        %v1583 = vpop.f32.mrf.mxu0
        %v1584 = vadd.f32 %v1350, %v1583
        %v1585 = vpop.f32.mrf.mxu0
        %v1586 = vadd.f32 %v1352, %v1585
        %1587 = vmatmul.bf16.gmra.mxu0 %v1381
        %v1588 = vpop.f32.mrf.mxu0
        %v1589 = vadd.f32 %v1354, %v1588
        %v1590 = vpop.f32.mrf.mxu0
        %v1591 = vadd.f32 %v1356, %v1590
        %1592 = vdwg.mxu0
        %1593 = vmatpush.bf16.msra.mxu0 %v1526
        %1594 = vmatpush.bf16.msra.mxu0 %v1524
        %1595 = vmatpush.bf16.msra.mxu0 %v1522
        %1596 = vmatpush.bf16.msra.mxu0 %v1520
        %1597 = vmatpush.bf16.msra.mxu0 %v1518
        %1598 = vmatpush.bf16.msra.mxu0 %v1516
        %1599 = vmatpush.bf16.msra.mxu0 %v1514
        %1600 = vmatpush.bf16.msra.mxu0 %v1512
        %1601 = vmatmul.bf16.gmra.mxu0 %v1379
        %v1602 = vpop.f32.mrf.mxu0
        %v1603 = vadd.f32 %v1584, %v1602
        %v1604 = vpop.f32.mrf.mxu0
        %v1605 = vadd.f32 %v1586, %v1604
        %1606 = vmatmul.bf16.gmra.mxu0 %v1382
        %v1607 = vpop.f32.mrf.mxu0
        %v1608 = vadd.f32 %v1589, %v1607
        %v1609 = vpop.f32.mrf.mxu0
        %v1610 = vadd.f32 %v1591, %v1609
        %1611 = vdwg.mxu0
        %1612 = vmatpush.bf16.msra.mxu0 0
        %1613 = vmatpush.bf16.msra.mxu0 0
        %1614 = vmatpush.bf16.msra.mxu0 0
        %1615 = vmatpush.bf16.msra.mxu0 0
        %1616 = vmatpush.bf16.msra.mxu0 0
        %1617 = vmatpush.bf16.msra.mxu0 0
        %1618 = vmatpush.bf16.msra.mxu0 %v1530
        %1619 = vmatpush.bf16.msra.mxu0 %v1528
        %1620 = vmatmul.bf16.gmra.mxu0 %v1569
        %v1621 = vpop.f32.mrf.mxu0
        %v1622 = vadd.f32 %v1603, %v1621
        %v1623 = vpop.f32.mrf.mxu0
        %v1624 = vadd.f32 %v1605, %v1623
        %1625 = vmatmul.bf16.gmra.mxu0 %v1572
        %v1626 = vpop.f32.mrf.mxu0
        %v1627 = vadd.f32 %v1608, %v1626
        %v1628 = vpop.f32.mrf.mxu0
        %v1629 = vadd.f32 %v1610, %v1628
        %1630 = vdwg.mxu0
        %1631 = vmatpush.bf16.msra.mxu0 %v1511
        %1632 = vmatpush.bf16.msra.mxu0 %v1509
        %1633 = vmatpush.bf16.msra.mxu0 %v1507
        %1634 = vmatpush.bf16.msra.mxu0 %v1505
        %1635 = vmatpush.bf16.msra.mxu0 %v1503
        %1636 = vmatpush.bf16.msra.mxu0 %v1501
        %1637 = vmatpush.bf16.msra.mxu0 %v1499
        %1638 = vmatpush.bf16.msra.mxu0 %v1497
        %1639 = vmatmul.bf16.gmra.mxu0 %v1378
        %v1640 = vpop.f32.mrf.mxu0
        %v1641 = vadd.f32 %v1351, %v1640
        %v1642 = vpop.f32.mrf.mxu0
        %v1643 = vadd.f32 %v1353, %v1642
        %1644 = vmatmul.bf16.gmra.mxu0 %v1381
        %v1645 = vpop.f32.mrf.mxu0
        %v1646 = vadd.f32 %v1355, %v1645
        %v1647 = vpop.f32.mrf.mxu0
        %v1648 = vadd.f32 %v1357, %v1647
        %1649 = vdwg.mxu0
        %1650 = vmatpush.bf16.msra.mxu0 %v1527
        %1651 = vmatpush.bf16.msra.mxu0 %v1525
        %1652 = vmatpush.bf16.msra.mxu0 %v1523
        %1653 = vmatpush.bf16.msra.mxu0 %v1521
        %1654 = vmatpush.bf16.msra.mxu0 %v1519
        %1655 = vmatpush.bf16.msra.mxu0 %v1517
        %1656 = vmatpush.bf16.msra.mxu0 %v1515
        %1657 = vmatpush.bf16.msra.mxu0 %v1513
        %1658 = vmatmul.bf16.gmra.mxu0 %v1379
        %v1659 = vpop.f32.mrf.mxu0
        %v1660 = vadd.f32 %v1641, %v1659
        %v1661 = vpop.f32.mrf.mxu0
        %v1662 = vadd.f32 %v1643, %v1661
        %1663 = vmatmul.bf16.gmra.mxu0 %v1382
        %v1664 = vpop.f32.mrf.mxu0
        %v1665 = vadd.f32 %v1646, %v1664
        %v1666 = vpop.f32.mrf.mxu0
        %v1667 = vadd.f32 %v1648, %v1666
        %1668 = vdwg.mxu0
        %1669 = vmatpush.bf16.msra.mxu0 0
        %1670 = vmatpush.bf16.msra.mxu0 0
        %1671 = vmatpush.bf16.msra.mxu0 0
        %1672 = vmatpush.bf16.msra.mxu0 0
        %1673 = vmatpush.bf16.msra.mxu0 0
        %1674 = vmatpush.bf16.msra.mxu0 0
        %1675 = vmatpush.bf16.msra.mxu0 %v1531
        %1676 = vmatpush.bf16.msra.mxu0 %v1529
        %1677 = vmatmul.bf16.gmra.mxu0 %v1569
        %v1678 = vpop.f32.mrf.mxu0
        %v1679 = vadd.f32 %v1660, %v1678
        %v1680 = vpop.f32.mrf.mxu0
        %v1681 = vadd.f32 %v1662, %v1680
        %1682 = vmatmul.bf16.gmra.mxu0 %v1572
        %v1683 = vpop.f32.mrf.mxu0
        %v1684 = vadd.f32 %v1665, %v1683
        %v1685 = vpop.f32.mrf.mxu0
        %v1686 = vadd.f32 %v1667, %v1685
        %1687 = vdwg.mxu0
        %v1688 = vld [vmem:[%s10] sm:$0xff]
        %v1689 = vld [vmem:[%s10 + $0x8] sm:$0xff]
        %v1690 = vld [vmem:[%s10 + $0x10] sm:$0xff]
        %v1691 = vld [vmem:[%s10 + $0x18] sm:$0xff]
        %v1692 = vld [vmem:[%s9] sm:$0xff]
        %v1693 = vld [vmem:[%s9 + $0x8] sm:$0xff]
        %v1694 = vld [vmem:[%s9 + $0x10] sm:$0xff]
        %v1695 = vld [vmem:[%s9 + $0x18] sm:$0xff]
        %v1696 = vmul.f32 %v1622, %v1622
        %v1697 = vmul.f32 %v1624, %v1624
        %v1698 = vmul.f32 %v1627, %v1627
        %v1699 = vmul.f32 %v1629, %v1629
        %1700 = vadd.xlane.f32.xlu0 %v1696
        %v1701 = vpop.xlane.xlu0 %1700
        %1702 = vadd.xlane.f32.xlu0 %v1697
        %v1703 = vpop.xlane.xlu0 %1702
        %1704 = vadd.xlane.f32.xlu0 %v1698
        %v1705 = vpop.xlane.xlu0 %1704
        %1706 = vadd.xlane.f32.xlu0 %v1699
        %v1707 = vpop.xlane.xlu0 %1706
        %v1708 = vmax.f32 %v1701, 1e-24
        %v1709 = vmax.f32 %v1703, 1e-24
        %v1710 = vmax.f32 %v1705, 1e-24
        %v1711 = vmax.f32 %v1707, 1e-24
        %v1712 = vrsqrt.pop %v1708
        %v1713 = vmul.f32 %v1712, %v1708
        %v1714 = vmul.f32 %v1713, %v1712
        %v1715 = vmul.f32 0.5, %v1714
        %v1716 = vsub.f32 1.5, %v1715
        %v1717 = vmul.f32 %v1712, %v1716
        %vm1718 = vweird.f32 %v1708
        %vm1719 = vweird.f32 %v1712
        %vm1720 = vmor %vm1718, %vm1719
        %v1721 = vsel %vm1720, %v1712, %v1717
        %v1722 = vrsqrt.pop %v1709
        %v1723 = vmul.f32 %v1722, %v1709
        %v1724 = vmul.f32 %v1723, %v1722
        %v1725 = vmul.f32 0.5, %v1724
        %v1726 = vsub.f32 1.5, %v1725
        %v1727 = vmul.f32 %v1722, %v1726
        %vm1728 = vweird.f32 %v1709
        %vm1729 = vweird.f32 %v1722
        %vm1730 = vmor %vm1728, %vm1729
        %v1731 = vsel %vm1730, %v1722, %v1727
        %v1732 = vrsqrt.pop %v1710
        %v1733 = vmul.f32 %v1732, %v1710
        %v1734 = vmul.f32 %v1733, %v1732
        %v1735 = vmul.f32 0.5, %v1734
        %v1736 = vsub.f32 1.5, %v1735
        %v1737 = vmul.f32 %v1732, %v1736
        %vm1738 = vweird.f32 %v1710
        %vm1739 = vweird.f32 %v1732
        %vm1740 = vmor %vm1738, %vm1739
        %v1741 = vsel %vm1740, %v1732, %v1737
        %v1742 = vrsqrt.pop %v1711
        %v1743 = vmul.f32 %v1742, %v1711
        %v1744 = vmul.f32 %v1743, %v1742
        %v1745 = vmul.f32 0.5, %v1744
        %v1746 = vsub.f32 1.5, %v1745
        %v1747 = vmul.f32 %v1742, %v1746
        %vm1748 = vweird.f32 %v1711
        %vm1749 = vweird.f32 %v1742
        %vm1750 = vmor %vm1748, %vm1749
        %v1751 = vsel %vm1750, %v1742, %v1747
        %v1752 = vmul.f32 %v644, %v644
        %v1753 = vmul.f32 %v646, %v646
        %v1754 = vmul.f32 %v648, %v648
        %v1755 = vmul.f32 %v650, %v650
        %1756 = vadd.xlane.f32.xlu0 %v1752
        %v1757 = vpop.xlane.xlu0 %1756
        %1758 = vadd.xlane.f32.xlu0 %v1753
        %v1759 = vpop.xlane.xlu0 %1758
        %1760 = vadd.xlane.f32.xlu0 %v1754
        %v1761 = vpop.xlane.xlu0 %1760
        %1762 = vadd.xlane.f32.xlu0 %v1755
        %v1763 = vpop.xlane.xlu0 %1762
        %v1764 = vmax.f32 %v1757, 1e-24
        %v1765 = vmax.f32 %v1759, 1e-24
        %v1766 = vmax.f32 %v1761, 1e-24
        %v1767 = vmax.f32 %v1763, 1e-24
        %v1768 = vrsqrt.pop %v1764
        %v1769 = vmul.f32 %v1768, %v1764
        %v1770 = vmul.f32 %v1769, %v1768
        %v1771 = vmul.f32 0.5, %v1770
        %v1772 = vsub.f32 1.5, %v1771
        %v1773 = vmul.f32 %v1768, %v1772
        %vm1774 = vweird.f32 %v1764
        %vm1775 = vweird.f32 %v1768
        %vm1776 = vmor %vm1774, %vm1775
        %v1777 = vsel %vm1776, %v1768, %v1773
        %v1778 = vrsqrt.pop %v1765
        %v1779 = vmul.f32 %v1778, %v1765
        %v1780 = vmul.f32 %v1779, %v1778
        %v1781 = vmul.f32 0.5, %v1780
        %v1782 = vsub.f32 1.5, %v1781
        %v1783 = vmul.f32 %v1778, %v1782
        %vm1784 = vweird.f32 %v1765
        %vm1785 = vweird.f32 %v1778
        %vm1786 = vmor %vm1784, %vm1785
        %v1787 = vsel %vm1786, %v1778, %v1783
        %v1788 = vrsqrt.pop %v1766
        %v1789 = vmul.f32 %v1788, %v1766
        %v1790 = vmul.f32 %v1789, %v1788
        %v1791 = vmul.f32 0.5, %v1790
        %v1792 = vsub.f32 1.5, %v1791
        %v1793 = vmul.f32 %v1788, %v1792
        %vm1794 = vweird.f32 %v1766
        %vm1795 = vweird.f32 %v1788
        %vm1796 = vmor %vm1794, %vm1795
        %v1797 = vsel %vm1796, %v1788, %v1793
        %v1798 = vrsqrt.pop %v1767
        %v1799 = vmul.f32 %v1798, %v1767
        %v1800 = vmul.f32 %v1799, %v1798
        %v1801 = vmul.f32 0.5, %v1800
        %v1802 = vsub.f32 1.5, %v1801
        %v1803 = vmul.f32 %v1798, %v1802
        %vm1804 = vweird.f32 %v1767
        %vm1805 = vweird.f32 %v1798
        %vm1806 = vmor %vm1804, %vm1805
        %v1807 = vsel %vm1806, %v1798, %v1803
        %v1808 = vmul.f32 %v1721, %v1692
        %v1809 = vmul.f32 %v1731, %v1693
        %v1810 = vmul.f32 %v1741, %v1694
        %v1811 = vmul.f32 %v1751, %v1695
        %1813 = vset.pattern.permute.xlu0 0
        %1814 = vperm.xlu0 %1813, %v1808
        %v1815 = vpop.permute.xlu0 %1814
        %1818 = vset.pattern.permute.xlu0 0
        %1819 = vperm.xlu0 %1818, %v1809
        %v1820 = vpop.permute.xlu0 %1819
        %1823 = vset.pattern.permute.xlu0 0
        %1824 = vperm.xlu0 %1823, %v1810
        %v1825 = vpop.permute.xlu0 %1824
        %1828 = vset.pattern.permute.xlu0 0
        %1829 = vperm.xlu0 %1828, %v1811
        %v1830 = vpop.permute.xlu0 %1829
        %v1832 = vmul.f32 %v1622, %v1815
        %v1833 = vmul.f32 %v1624, %v1820
        %v1834 = vmul.f32 %v1627, %v1825
        %v1835 = vmul.f32 %v1629, %v1830
        %v1836 = vpack.c.bf16 %v1833, %v1832
        %v1837 = vpack.c.bf16 %v1835, %v1834
        %v1838 = vmul.f32 %v644, %v1777
        %v1839 = vmul.f32 %v646, %v1787
        %v1840 = vmul.f32 %v648, %v1797
        %v1841 = vmul.f32 %v650, %v1807
        %v1842 = vpack.c.bf16 %v1839, %v1838
        %v1843 = vpack.c.bf16 %v1841, %v1840
        %1844 = vmatpush.bf16.xpose.msra.mxu0 0
        %1845 = vmatpush.bf16.xpose.msra.mxu0 0
        %1846 = vmatpush.bf16.xpose.msra.mxu0 0
        %1847 = vmatpush.bf16.xpose.msra.mxu0 0
        %1848 = vmatpush.bf16.xpose.msra.mxu0 0
        %1849 = vmatpush.bf16.xpose.msra.mxu0 0
        %1850 = vmatpush.bf16.xpose.msra.mxu0 %v1843
        %1851 = vmatpush.bf16.xpose.msra.mxu0 %v1842
        %1852 = vmatmul.bf16.gmra.mxu0 %v1836
        %v1853 = vpop.f32.mrf.mxu0
        %v1854 = vadd.f32 0.0, %v1853
        %v1855 = vpop.f32.mrf.mxu0
        %v1856 = vadd.f32 0.0, %v1855
        %1857 = vmatmul.bf16.gmra.mxu0 %v1837
        %v1858 = vpop.f32.mrf.mxu0
        %v1859 = vadd.f32 0.0, %v1858
        %v1860 = vpop.f32.mrf.mxu0
        %v1861 = vadd.f32 0.0, %v1860
        %1862 = vdwg.mxu0
        %v1863 = vsel %vm567, %v1854, -inf
        %1864 = vmax.xlane.f32.xlu0 %v1863
        %v1865 = vpop.xlane.xlu0 %1864
        %v1866 = vsel %vm567, %v1856, -inf
        %1867 = vmax.xlane.f32.xlu0 %v1866
        %v1868 = vpop.xlane.xlu0 %1867
        %v1869 = vsel %vm567, %v1859, -inf
        %1870 = vmax.xlane.f32.xlu0 %v1869
        %v1871 = vpop.xlane.xlu0 %1870
        %v1872 = vsel %vm567, %v1861, -inf
        %1873 = vmax.xlane.f32.xlu0 %v1872
        %v1874 = vpop.xlane.xlu0 %1873
        %v1875 = vsub.f32 %v1854, %v1865
        %v1876 = vsub.f32 %v1856, %v1868
        %v1877 = vsub.f32 %v1859, %v1871
        %v1878 = vsub.f32 %v1861, %v1874
        %v1879 = vmul.f32 %v1875, 1.442695
        %v1880 = vpow.pop %v1879
        %v1881 = vmul.f32 %v1876, 1.442695
        %v1882 = vpow.pop %v1881
        %v1883 = vmul.f32 %v1877, 1.442695
        %v1884 = vpow.pop %v1883
        %v1885 = vmul.f32 %v1878, 1.442695
        %v1886 = vpow.pop %v1885
        %v1887 = vmul.f32 %v1880, %v1688
        %v1888 = vmul.f32 %v1882, %v1689
        %v1889 = vmul.f32 %v1884, %v1690
        %v1890 = vmul.f32 %v1886, %v1691
        %v1891 = vsel %vm567, %v1887, 0.0
        %1892 = vadd.xlane.f32.xlu0 %v1891
        %v1893 = vpop.xlane.xlu0 %1892
        %v1894 = vsel %vm567, %v1888, 0.0
        %1895 = vadd.xlane.f32.xlu0 %v1894
        %v1896 = vpop.xlane.xlu0 %1895
        %v1897 = vsel %vm567, %v1889, 0.0
        %1898 = vadd.xlane.f32.xlu0 %v1897
        %v1899 = vpop.xlane.xlu0 %1898
        %v1900 = vsel %vm567, %v1890, 0.0
        %1901 = vadd.xlane.f32.xlu0 %v1900
        %v1902 = vpop.xlane.xlu0 %1901
        %v1903 = vrcp.pop %v1893
        %v1904 = vrcp.pop %v1896
        %v1905 = vrcp.pop %v1899
        %v1906 = vrcp.pop %v1902
        %v1907 = vmul.f32 %v1887, %v1903
        %v1908 = vmul.f32 %v1888, %v1904
        %v1909 = vmul.f32 %v1889, %v1905
        %v1910 = vmul.f32 %v1890, %v1906
        %v1911 = vpack.c.bf16 %v1908, %v1907
        %v1912 = vpack.c.bf16 %v1910, %v1909
        %v1913 = vpack.c.bf16 %v602, %v600
        %v1914 = vpack.c.bf16 %v607, %v605
        %v1916 = vsel %vm567, %v1911, 0
        %v1919 = vsel %vm567, %v1912, 0
        %1921 = vmatpush.bf16.msra.mxu0 0
        %1922 = vmatpush.bf16.msra.mxu0 0
        %1923 = vmatpush.bf16.msra.mxu0 0
        %1924 = vmatpush.bf16.msra.mxu0 0
        %1925 = vmatpush.bf16.msra.mxu0 0
        %1926 = vmatpush.bf16.msra.mxu0 0
        %1927 = vmatpush.bf16.msra.mxu0 %v1914
        %1928 = vmatpush.bf16.msra.mxu0 %v1913
        %1929 = vmatmul.bf16.gmra.mxu0 %v1916
        %v1930 = vpop.f32.mrf.mxu0
        %v1931 = vadd.f32 0.0, %v1930
        %v1932 = vpop.f32.mrf.mxu0
        %v1933 = vadd.f32 0.0, %v1932
        %1934 = vmatmul.bf16.gmra.mxu0 %v1919
        %v1935 = vpop.f32.mrf.mxu0
        %v1936 = vadd.f32 0.0, %v1935
        %v1937 = vpop.f32.mrf.mxu0
        %v1938 = vadd.f32 0.0, %v1937
        %1939 = vdwg.mxu0
        %v1940 = vpack.c.bf16 %v1931, %v1931
        %v1941 = vpack.c.bf16 %v1933, %v1933
        %v1942 = vpack.c.bf16 %v1936, %v1936
        %v1943 = vpack.c.bf16 %v1938, %v1938
        %v1944 = vmul.f32 %v1679, %v1679
        %v1945 = vmul.f32 %v1681, %v1681
        %v1946 = vmul.f32 %v1684, %v1684
        %v1947 = vmul.f32 %v1686, %v1686
        %1948 = vadd.xlane.f32.xlu0 %v1944
        %v1949 = vpop.xlane.xlu0 %1948
        %1950 = vadd.xlane.f32.xlu0 %v1945
        %v1951 = vpop.xlane.xlu0 %1950
        %1952 = vadd.xlane.f32.xlu0 %v1946
        %v1953 = vpop.xlane.xlu0 %1952
        %1954 = vadd.xlane.f32.xlu0 %v1947
        %v1955 = vpop.xlane.xlu0 %1954
        %v1956 = vmax.f32 %v1949, 1e-24
        %v1957 = vmax.f32 %v1951, 1e-24
        %v1958 = vmax.f32 %v1953, 1e-24
        %v1959 = vmax.f32 %v1955, 1e-24
        %v1960 = vrsqrt.pop %v1956
        %v1961 = vmul.f32 %v1960, %v1956
        %v1962 = vmul.f32 %v1961, %v1960
        %v1963 = vmul.f32 0.5, %v1962
        %v1964 = vsub.f32 1.5, %v1963
        %v1965 = vmul.f32 %v1960, %v1964
        %vm1966 = vweird.f32 %v1956
        %vm1967 = vweird.f32 %v1960
        %vm1968 = vmor %vm1966, %vm1967
        %v1969 = vsel %vm1968, %v1960, %v1965
        %v1970 = vrsqrt.pop %v1957
        %v1971 = vmul.f32 %v1970, %v1957
        %v1972 = vmul.f32 %v1971, %v1970
        %v1973 = vmul.f32 0.5, %v1972
        %v1974 = vsub.f32 1.5, %v1973
        %v1975 = vmul.f32 %v1970, %v1974
        %vm1976 = vweird.f32 %v1957
        %vm1977 = vweird.f32 %v1970
        %vm1978 = vmor %vm1976, %vm1977
        %v1979 = vsel %vm1978, %v1970, %v1975
        %v1980 = vrsqrt.pop %v1958
        %v1981 = vmul.f32 %v1980, %v1958
        %v1982 = vmul.f32 %v1981, %v1980
        %v1983 = vmul.f32 0.5, %v1982
        %v1984 = vsub.f32 1.5, %v1983
        %v1985 = vmul.f32 %v1980, %v1984
        %vm1986 = vweird.f32 %v1958
        %vm1987 = vweird.f32 %v1980
        %vm1988 = vmor %vm1986, %vm1987
        %v1989 = vsel %vm1988, %v1980, %v1985
        %v1990 = vrsqrt.pop %v1959
        %v1991 = vmul.f32 %v1990, %v1959
        %v1992 = vmul.f32 %v1991, %v1990
        %v1993 = vmul.f32 0.5, %v1992
        %v1994 = vsub.f32 1.5, %v1993
        %v1995 = vmul.f32 %v1990, %v1994
        %vm1996 = vweird.f32 %v1959
        %vm1997 = vweird.f32 %v1990
        %vm1998 = vmor %vm1996, %vm1997
        %v1999 = vsel %vm1998, %v1990, %v1995
        %v2000 = vmul.f32 %v645, %v645
        %v2001 = vmul.f32 %v647, %v647
        %v2002 = vmul.f32 %v649, %v649
        %v2003 = vmul.f32 %v651, %v651
        %2004 = vadd.xlane.f32.xlu0 %v2000
        %v2005 = vpop.xlane.xlu0 %2004
        %2006 = vadd.xlane.f32.xlu0 %v2001
        %v2007 = vpop.xlane.xlu0 %2006
        %2008 = vadd.xlane.f32.xlu0 %v2002
        %v2009 = vpop.xlane.xlu0 %2008
        %2010 = vadd.xlane.f32.xlu0 %v2003
        %v2011 = vpop.xlane.xlu0 %2010
        %v2012 = vmax.f32 %v2005, 1e-24
        %v2013 = vmax.f32 %v2007, 1e-24
        %v2014 = vmax.f32 %v2009, 1e-24
        %v2015 = vmax.f32 %v2011, 1e-24
        %v2016 = vrsqrt.pop %v2012
        %v2017 = vmul.f32 %v2016, %v2012
        %v2018 = vmul.f32 %v2017, %v2016
        %v2019 = vmul.f32 0.5, %v2018
        %v2020 = vsub.f32 1.5, %v2019
        %v2021 = vmul.f32 %v2016, %v2020
        %vm2022 = vweird.f32 %v2012
        %vm2023 = vweird.f32 %v2016
        %vm2024 = vmor %vm2022, %vm2023
        %v2025 = vsel %vm2024, %v2016, %v2021
        %v2026 = vrsqrt.pop %v2013
        %v2027 = vmul.f32 %v2026, %v2013
        %v2028 = vmul.f32 %v2027, %v2026
        %v2029 = vmul.f32 0.5, %v2028
        %v2030 = vsub.f32 1.5, %v2029
        %v2031 = vmul.f32 %v2026, %v2030
        %vm2032 = vweird.f32 %v2013
        %vm2033 = vweird.f32 %v2026
        %vm2034 = vmor %vm2032, %vm2033
        %v2035 = vsel %vm2034, %v2026, %v2031
        %v2036 = vrsqrt.pop %v2014
        %v2037 = vmul.f32 %v2036, %v2014
        %v2038 = vmul.f32 %v2037, %v2036
        %v2039 = vmul.f32 0.5, %v2038
        %v2040 = vsub.f32 1.5, %v2039
        %v2041 = vmul.f32 %v2036, %v2040
        %vm2042 = vweird.f32 %v2014
        %vm2043 = vweird.f32 %v2036
        %vm2044 = vmor %vm2042, %vm2043
        %v2045 = vsel %vm2044, %v2036, %v2041
        %v2046 = vrsqrt.pop %v2015
        %v2047 = vmul.f32 %v2046, %v2015
        %v2048 = vmul.f32 %v2047, %v2046
        %v2049 = vmul.f32 0.5, %v2048
        %v2050 = vsub.f32 1.5, %v2049
        %v2051 = vmul.f32 %v2046, %v2050
        %vm2052 = vweird.f32 %v2015
        %vm2053 = vweird.f32 %v2046
        %vm2054 = vmor %vm2052, %vm2053
        %v2055 = vsel %vm2054, %v2046, %v2051
        %v2056 = vmul.f32 %v1969, %v1692
        %v2057 = vmul.f32 %v1979, %v1693
        %v2058 = vmul.f32 %v1989, %v1694
        %v2059 = vmul.f32 %v1999, %v1695
        %2061 = vset.pattern.permute.xlu0 0
        %2062 = vperm.xlu0 %2061, %v2056
        %v2063 = vpop.permute.xlu0 %2062
        %2066 = vset.pattern.permute.xlu0 0
        %2067 = vperm.xlu0 %2066, %v2057
        %v2068 = vpop.permute.xlu0 %2067
        %2071 = vset.pattern.permute.xlu0 0
        %2072 = vperm.xlu0 %2071, %v2058
        %v2073 = vpop.permute.xlu0 %2072
        %2076 = vset.pattern.permute.xlu0 0
        %2077 = vperm.xlu0 %2076, %v2059
        %v2078 = vpop.permute.xlu0 %2077
        %v2080 = vmul.f32 %v1679, %v2063
        %v2081 = vmul.f32 %v1681, %v2068
        %v2082 = vmul.f32 %v1684, %v2073
        %v2083 = vmul.f32 %v1686, %v2078
        %v2084 = vpack.c.bf16 %v2081, %v2080
        %v2085 = vpack.c.bf16 %v2083, %v2082
        %v2086 = vmul.f32 %v645, %v2025
        %v2087 = vmul.f32 %v647, %v2035
        %v2088 = vmul.f32 %v649, %v2045
        %v2089 = vmul.f32 %v651, %v2055
        %v2090 = vpack.c.bf16 %v2087, %v2086
        %v2091 = vpack.c.bf16 %v2089, %v2088
        %2092 = vmatpush.bf16.xpose.msra.mxu0 0
        %2093 = vmatpush.bf16.xpose.msra.mxu0 0
        %2094 = vmatpush.bf16.xpose.msra.mxu0 0
        %2095 = vmatpush.bf16.xpose.msra.mxu0 0
        %2096 = vmatpush.bf16.xpose.msra.mxu0 0
        %2097 = vmatpush.bf16.xpose.msra.mxu0 0
        %2098 = vmatpush.bf16.xpose.msra.mxu0 %v2091
        %2099 = vmatpush.bf16.xpose.msra.mxu0 %v2090
        %2100 = vmatmul.bf16.gmra.mxu0 %v2084
        %v2101 = vpop.f32.mrf.mxu0
        %v2102 = vadd.f32 0.0, %v2101
        %v2103 = vpop.f32.mrf.mxu0
        %v2104 = vadd.f32 0.0, %v2103
        %2105 = vmatmul.bf16.gmra.mxu0 %v2085
        %v2106 = vpop.f32.mrf.mxu0
        %v2107 = vadd.f32 0.0, %v2106
        %v2108 = vpop.f32.mrf.mxu0
        %v2109 = vadd.f32 0.0, %v2108
        %2110 = vdwg.mxu0
        %v2111 = vsel %vm567, %v2102, -inf
        %2112 = vmax.xlane.f32.xlu0 %v2111
        %v2113 = vpop.xlane.xlu0 %2112
        %v2114 = vsel %vm567, %v2104, -inf
        %2115 = vmax.xlane.f32.xlu0 %v2114
        %v2116 = vpop.xlane.xlu0 %2115
        %v2117 = vsel %vm567, %v2107, -inf
        %2118 = vmax.xlane.f32.xlu0 %v2117
        %v2119 = vpop.xlane.xlu0 %2118
        %v2120 = vsel %vm567, %v2109, -inf
        %2121 = vmax.xlane.f32.xlu0 %v2120
        %v2122 = vpop.xlane.xlu0 %2121
        %v2123 = vsub.f32 %v2102, %v2113
        %v2124 = vsub.f32 %v2104, %v2116
        %v2125 = vsub.f32 %v2107, %v2119
        %v2126 = vsub.f32 %v2109, %v2122
        %v2127 = vmul.f32 %v2123, 1.442695
        %v2128 = vpow.pop %v2127
        %v2129 = vmul.f32 %v2124, 1.442695
        %v2130 = vpow.pop %v2129
        %v2131 = vmul.f32 %v2125, 1.442695
        %v2132 = vpow.pop %v2131
        %v2133 = vmul.f32 %v2126, 1.442695
        %v2134 = vpow.pop %v2133
        %v2135 = vmul.f32 %v2128, %v1688
        %v2136 = vmul.f32 %v2130, %v1689
        %v2137 = vmul.f32 %v2132, %v1690
        %v2138 = vmul.f32 %v2134, %v1691
        %v2139 = vsel %vm567, %v2135, 0.0
        %2140 = vadd.xlane.f32.xlu0 %v2139
        %v2141 = vpop.xlane.xlu0 %2140
        %v2142 = vsel %vm567, %v2136, 0.0
        %2143 = vadd.xlane.f32.xlu0 %v2142
        %v2144 = vpop.xlane.xlu0 %2143
        %v2145 = vsel %vm567, %v2137, 0.0
        %2146 = vadd.xlane.f32.xlu0 %v2145
        %v2147 = vpop.xlane.xlu0 %2146
        %v2148 = vsel %vm567, %v2138, 0.0
        %2149 = vadd.xlane.f32.xlu0 %v2148
        %v2150 = vpop.xlane.xlu0 %2149
        %v2151 = vrcp.pop %v2141
        %v2152 = vrcp.pop %v2144
        %v2153 = vrcp.pop %v2147
        %v2154 = vrcp.pop %v2150
        %v2155 = vmul.f32 %v2135, %v2151
        %v2156 = vmul.f32 %v2136, %v2152
        %v2157 = vmul.f32 %v2137, %v2153
        %v2158 = vmul.f32 %v2138, %v2154
        %v2159 = vpack.c.bf16 %v2156, %v2155
        %v2160 = vpack.c.bf16 %v2158, %v2157
        %v2161 = vpack.c.bf16 %v631, %v629
        %v2162 = vpack.c.bf16 %v636, %v634
        %v2164 = vsel %vm567, %v2159, 0
        %v2167 = vsel %vm567, %v2160, 0
        %2169 = vmatpush.bf16.msra.mxu0 0
        %2170 = vmatpush.bf16.msra.mxu0 0
        %2171 = vmatpush.bf16.msra.mxu0 0
        %2172 = vmatpush.bf16.msra.mxu0 0
        %2173 = vmatpush.bf16.msra.mxu0 0
        %2174 = vmatpush.bf16.msra.mxu0 0
        %2175 = vmatpush.bf16.msra.mxu0 %v2162
        %2176 = vmatpush.bf16.msra.mxu0 %v2161
        %2177 = vmatmul.bf16.gmra.mxu0 %v2164
        %v2178 = vpop.f32.mrf.mxu0
        %v2179 = vadd.f32 0.0, %v2178
        %v2180 = vpop.f32.mrf.mxu0
        %v2181 = vadd.f32 0.0, %v2180
        %2182 = vmatmul.bf16.gmra.mxu0 %v2167
        %v2183 = vpop.f32.mrf.mxu0
        %v2184 = vadd.f32 0.0, %v2183
        %v2185 = vpop.f32.mrf.mxu0
        %v2186 = vadd.f32 0.0, %v2185
        %2187 = vdwg.mxu0
        %v2188 = vpack.c.bf16 %v2179, %v2179
        %v2189 = vpack.c.bf16 %v2181, %v2181
        %v2190 = vpack.c.bf16 %v2184, %v2184
        %v2191 = vpack.c.bf16 %v2186, %v2186
        %v2196 = vunpack.c.l.b16 %v1940
        %v2197 = vunpack.c.l.b16 %v1941
        %v2198 = vunpack.c.l.b16 %v1942
        %v2199 = vunpack.c.l.b16 %v1943
        %v2200 = vpack.c.b16 %v2197, %v2196
        %v2201 = vpack.c.b16 %v2199, %v2198
        %v2208 = vunpack.c.l.b16 %v2188
        %v2209 = vunpack.c.l.b16 %v2189
        %v2210 = vunpack.c.l.b16 %v2190
        %v2211 = vunpack.c.l.b16 %v2191
        %v2212 = vpack.c.b16 %v2209, %v2208
        %v2213 = vpack.c.b16 %v2211, %v2210
        %v2216 = vld [vmem:[%s7] sm:$0xf]
        %v2217 = vld [vmem:[%s7 + $0x4] sm:$0xf]
        %v2218 = vld [vmem:[%s7 + $0x8] sm:$0xf]
        %v2219 = vld [vmem:[%s7 + $0xc] sm:$0xf]
        %v2220 = vld [vmem:[%s8] sm:$0xff]
        %v2221 = vld [vmem:[%s8 + $0x8] sm:$0xff]
        %v2222 = vld [vmem:[%s8 + $0x10] sm:$0xff]
        %v2223 = vld [vmem:[%s8 + $0x18] sm:$0xff]
        %2225 = vset.pattern.permute.xlu0 0
        %2226 = vperm.xlu0 %2225, %v2220
        %v2227 = vpop.permute.xlu0 %2226
        %2230 = vset.pattern.permute.xlu0 0
        %2231 = vperm.xlu0 %2230, %v2221
        %v2232 = vpop.permute.xlu0 %2231
        %2235 = vset.pattern.permute.xlu0 0
        %2236 = vperm.xlu0 %2235, %v2222
        %v2237 = vpop.permute.xlu0 %2236
        %2240 = vset.pattern.permute.xlu0 0
        %2241 = vperm.xlu0 %2240, %v2223
        %v2242 = vpop.permute.xlu0 %2241
        %v2248 = vunpack.c.l.b16 %v2216
        %v2249 = vunpack.c.l.b16 %v2217
        %v2250 = vunpack.c.l.b16 %v2218
        %v2251 = vunpack.c.l.b16 %v2219
        %v2252 = vpack.c.b16 %v2249, %v2248
        %v2253 = vpack.c.b16 %v2251, %v2250
        %v2255 = vsel %vm567, %v2252, 0
        %v2258 = vsel %vm567, %v2253, 0
        %2260 = vmatpush.bf16.msra.mxu0 0
        %2261 = vmatpush.bf16.msra.mxu0 0
        %2262 = vmatpush.bf16.msra.mxu0 0
        %2263 = vmatpush.bf16.msra.mxu0 0
        %2264 = vmatpush.bf16.msra.mxu0 0
        %2265 = vmatpush.bf16.msra.mxu0 0
        %2266 = vmatpush.bf16.msra.mxu0 %v2201
        %2267 = vmatpush.bf16.msra.mxu0 %v2200
        %2268 = vmatmul.bf16.gmra.mxu0 %v2255
        %v2269 = vpop.f32.mrf.mxu0
        %v2270 = vadd.f32 %v2227, %v2269
        %v2271 = vpop.f32.mrf.mxu0
        %v2272 = vadd.f32 %v2232, %v2271
        %2273 = vmatmul.bf16.gmra.mxu0 %v2258
        %v2274 = vpop.f32.mrf.mxu0
        %v2275 = vadd.f32 %v2237, %v2274
        %v2276 = vpop.f32.mrf.mxu0
        %v2277 = vadd.f32 %v2242, %v2276
        %2278 = vdwg.mxu0
        %2279 = vmatpush.bf16.msra.mxu0 0
        %2280 = vmatpush.bf16.msra.mxu0 0
        %2281 = vmatpush.bf16.msra.mxu0 0
        %2282 = vmatpush.bf16.msra.mxu0 0
        %2283 = vmatpush.bf16.msra.mxu0 0
        %2284 = vmatpush.bf16.msra.mxu0 0
        %2285 = vmatpush.bf16.msra.mxu0 %v2213
        %2286 = vmatpush.bf16.msra.mxu0 %v2212
        %2287 = vmatmul.bf16.gmra.mxu0 %v2255
        %v2288 = vpop.f32.mrf.mxu0
        %v2289 = vadd.f32 %v2227, %v2288
        %v2290 = vpop.f32.mrf.mxu0
        %v2291 = vadd.f32 %v2232, %v2290
        %2292 = vmatmul.bf16.gmra.mxu0 %v2258
        %v2293 = vpop.f32.mrf.mxu0
        %v2294 = vadd.f32 %v2237, %v2293
        %v2295 = vpop.f32.mrf.mxu0
        %v2296 = vadd.f32 %v2242, %v2295
        %2297 = vdwg.mxu0
        %vm2298 = vcmask 392192
        %2299 = vst.msk [vmem:[%s423] sm:$0xff] %vm2298, %v2270
        %2300 = vst.msk [vmem:[%s423 + $0x8] sm:$0xff] %vm2298, %v2272
        %2301 = vst.msk [vmem:[%s423 + $0x10] sm:$0xff] %vm2298, %v2275
        %2302 = vst.msk [vmem:[%s423 + $0x18] sm:$0xff] %vm2298, %v2277
        %2303 = vst.msk [vmem:[%s423 + $0x20] sm:$0xff] %vm2298, %v2289
        %2304 = vst.msk [vmem:[%s423 + $0x28] sm:$0xff] %vm2298, %v2291
        %2305 = vst.msk [vmem:[%s423 + $0x30] sm:$0xff] %vm2298, %v2294
        %2306 = vst.msk [vmem:[%s423 + $0x38] sm:$0xff] %vm2298, %v2296
        %s2307 = sand.u32 %s296, 1
        %s2308 = scalar_lea.sflag [#allocation5], %s2307
        %s2309 = sand.u32 %s296, 1
        %s2310 = smul.addr %s2309, 64
        %s2311 = scalar_lea.vmem [#allocation4], %s2310
        // Predicated region
        $region69: #{attention1_forward.1} parent=67 // pred_check
          %p2312 = pneg %p306
        $region70: #{attention1_forward.1} parent=67 // pred_check_branch
          %2314 = sbr.rel (%p2312) target = $region72
        $region71: #{attention1_forward.1} parent=67 // pred_region
          %s2315 = smul.u32 8, %s26
          %2317 = vsyncadd %s2308, 0
          %s2318 = smul.addr %s2315, 8
          %s2319 = scalar_lea.hbm %s12, %s2318
          %s2320 = sshll.u32 %s2311, 4
          %s2321 = int_to_ptr.vmem [resolvable:$true] %s2320
          %s2322 = sshll.u32 %s2319, 4
          %s2323 = int_to_ptr.hbm [resolvable:$true] %s2322
          %2328 = dma.vmem_to_hbm [thread:$0]  %s2321, 1024, %s2323, %s2308, 128, 128, 8
        $region72: #{attention1_forward.1} parent=67 // pred_fallthru
          _
      $region68: #{attention1_forward.1} parent=5 // pred_fallthru
        _
      %p2329 = scmp.le.s32.totalorder 2, %s21
      // Predicated region
      $region73: #{attention1_forward.1} parent=5 // pred_check
        %p2330 = pneg %p2329
      $region74: #{attention1_forward.1} parent=5 // pred_check_branch
        %2332 = sbr.rel (%p2330) target = $region76
      $region75: #{attention1_forward.1} parent=5 // pred_region
        %s2333 = ssub.s32 %s21, 2
        // Predicated region
        $region77: #{attention1_forward.1} parent=75 // pred_check
          %p2334 = pneg %p312
        $region78: #{attention1_forward.1} parent=75 // pred_check_branch
          %2336 = sbr.rel (%p2334) target = $region80
        $region79: #{attention1_forward.1} parent=75 // pred_region
          %s2337 = sand.u32 %s297, 1
          %s2338 = scalar_lea.sflag [#allocation5], %s2337
          %s2339 = sand.u32 %s297, 1
          %s2340 = smul.addr %s2339, 64
          %s2341 = scalar_lea.vmem [#allocation4], %s2340
          %2343 = dma.done %s2338, 1024
        $region80: #{attention1_forward.1} parent=75 // pred_fallthru
          _
      $region76: #{attention1_forward.1} parent=5 // pred_fallthru
        _
    $region6: #{attention1_forward.1} parent=1 // loop_footer
      %s25 = sadd.s32 1, %s21
    $region7: #{attention1_forward.1} parent=1 // loop_footer_branch
      %20 = sbr.rel target = $region3
    $region8: #{attention1_forward.1} parent=1 // loop_exit
      _
    %2344 = vsyncpa [#allocation5], 1
    %s2345 = scalar_lea.sflag [#allocation5], 1
    %2346 = vsyncpa %s2345, 1

</llo_original>
